<compile_context>
chip_gen: v7x
topology: tpu7x:2x2x1
jax: 0.10.0
libtpu: 0.0.40
codegen_flags: <defaults>
</compile_context>

<pallas_src>
import jax
import jax.numpy as jnp
from jax import lax
from jax.experimental import pallas as pl
from jax.experimental.pallas import tpu as pltpu


# ----------------------------------------------------------------------------- #
# In-kernel depthwise convolution on (C, H*W)-laid-out activations
# ----------------------------------------------------------------------------- #
def _dw_tap_masks(H, W, ksize):
    """Hoisted per-tap combined (row & col) validity masks, each (1, H*W) f32."""
    HW = H * W
    pad = ksize // 2
    idx = lax.broadcasted_iota(jnp.int32, (1, HW), 1)     # flat spatial index
    col = idx % W
    masks = {}
    for kh in range(ksize):
        drow = kh - pad
        for kw in range(ksize):
            dcol = kw - pad
            if drow == 0 and dcol == 0:
                continue
            # row validity: 0 <= idx + drow*W < HW  (equivalent to 0 <= row+drow < H)
            valid = (idx + drow * W >= 0) & (idx + drow * W < HW)
            valid &= (col + dcol >= 0) & (col + dcol < W)
            masks[(drow, dcol)] = valid.astype(jnp.float32)
    return masks


def _dw_conv_flat(z, w_taps, masks, H, W, ksize):
    """Depthwise KxK conv (stride 1, zero padding) on z laid out as (C, H*W).

    z:       (C, H*W) f32 value.
    w_taps:  (K*K, C, 1) f32 value (BN-folded per-channel tap weights), hoisted load.
    masks:   dict {(drow, dcol): (1, H*W) f32} from _dw_tap_masks (hoisted).
    Returns  (C, H*W) f32 full-resolution conv output (decimate outside for stride 2).
    """
    C, HW = z.shape
    pad = ksize // 2
    acc = None
    for kh in range(ksize):
        drow = kh - pad
        for kw in range(ksize):
            dcol = kw - pad
            d = drow * W + dcol                       # flat (H*W) tap offset
            if d == 0:
                t = z
            else:
                # tap[p] = z[p + d]; wrapped / out-of-image lanes are masked to zero.
                # roll runs in the XLU slot and leaves the VALU for the MAC work.
                t = pltpu.roll(z, shift=(-d) % HW, axis=1) * masks[(drow, dcol)]
            term = t * w_taps[kh * ksize + kw]        # (C, H*W) * (C, 1)
            acc = term if acc is None else acc + term
    return acc


# ----------------------------------------------------------------------------- #
# Fused kernels (one pallas_call per block; B_tile images per grid step)
# ----------------------------------------------------------------------------- #
def _make_stride1_kernel(H, W, ksize, inp, n_imgs):
    HW = H * W

    def kernel(x_ref, w1_ref, b1_ref, wdw_ref, w2_ref, b2_ref, o_ref):
        # hoisted const loads (shared by all images of this grid step)
        w1 = w1_ref[...]                                  # (mid, inp)   bf16
        b1 = b1_ref[...]                                  # (mid, 1)     f32
        wdw = wdw_ref[...]                                # (K*K, mid, 1) f32
        w2 = w2_ref[...]                                  # (out, mid)   bf16
        b2 = b2_ref[...]                                  # (out, 1)     f32
        masks = _dw_tap_masks(H, W, ksize)                # hoisted once per grid step

        for b in range(n_imgs):                           # static unroll over images
            xb = x_ref[b]                                 # (inp, 2*HW)
            # channel shuffle is free: wrapper layout puts even channels in lanes [:HW]
            # (passthrough half) and odd channels in lanes [HW:] (branch_main input).
            x_even = xb[:, :HW]                           # lane-aligned slice
            x_odd = xb[:, HW:]                            # lane-aligned slice
            # branch_main: 1x1 (BN folded) + bias + ReLU
            y = jnp.dot(w1, x_odd.astype(jnp.bfloat16),
                        preferred_element_type=jnp.float32) + b1
            y = jnp.maximum(y, 0.0)                       # (mid, HW)
            # depthwise KxK (stride 1), BN scale folded into weights
            acc = _dw_conv_flat(y, wdw, masks, H, W, ksize)
            # 1x1 + bias + ReLU (dw-BN bias folded into b2)
            out = jnp.dot(w2, acc.astype(jnp.bfloat16),
                          preferred_element_type=jnp.float32) + b2
            out = jnp.maximum(out, 0.0)                   # (out, HW)
            # concat is free: two sublane-aligned sub-stores, no intermediate copy
            o_ref[b, :inp, :] = x_even.astype(o_ref.dtype)
            o_ref[b, inp:, :] = out.astype(o_ref.dtype)

    return kernel


def _make_stride2_kernel(H, W, ksize, inp, n_imgs):
    def kernel(x_ref, s_ref, wdw_ref, pw_ref, pb_ref,
               w1_ref, b1_ref, w2_ref, b2_ref, o_ref):
        S = s_ref[...]                                    # (HW, HW_out) bf16 0/1
        wdw = wdw_ref[...]                                # (K*K, inp+mid, 1) f32
        pw = pw_ref[...]                                  # (inp, inp)   bf16
        pb = pb_ref[...]                                  # (inp, 1)     f32
        w1 = w1_ref[...]                                  # (mid, inp)   bf16
        b1 = b1_ref[...]                                  # (mid, 1)     f32
        w2 = w2_ref[...]                                  # (out, mid)   bf16
        b2 = b2_ref[...]                                  # (out, 1)     f32
        masks = _dw_tap_masks(H, W, ksize)

        for b in range(n_imgs):                           # static unroll over images
            x = x_ref[b].astype(jnp.float32)              # (inp, HW)
            # branch_main first 1x1 (BN folded) + ReLU
            y = jnp.maximum(
                jnp.dot(w1, x.astype(jnp.bfloat16),
                        preferred_element_type=jnp.float32) + b1, 0.0)   # (mid, HW)
            # ONE depthwise pass computes both branches' dw convs (weights concatenated)
            z = jnp.concatenate([x, y], axis=0)           # (inp+mid, HW)
            acc = _dw_conv_flat(z, wdw, masks, H, W, ksize)
            # ONE fused stride-2 decimation matmul shared by both branches
            dec = jnp.dot(acc.astype(jnp.bfloat16), S,
                          preferred_element_type=jnp.float32)            # (inp+mid, HWo)
            # branch_proj: 1x1 + bias + ReLU   (dw-BN bias folded into pb)
            proj = jnp.maximum(
                jnp.dot(pw, dec[:inp].astype(jnp.bfloat16),
                        preferred_element_type=jnp.float32) + pb, 0.0)
            # branch_main: last 1x1 + bias + ReLU (dw-BN bias folded into b2)
            main = jnp.maximum(
                jnp.dot(w2, dec[inp:].astype(jnp.bfloat16),
                        preferred_element_type=jnp.float32) + b2, 0.0)
            o_ref[b, :inp, :] = proj.astype(o_ref.dtype)
            o_ref[b, inp:, :] = main.astype(o_ref.dtype)

    return kernel


# ----------------------------------------------------------------------------- #
# pallas_call builder
# ----------------------------------------------------------------------------- #
def _const_spec(a):
    nd = a.ndim
    return pl.BlockSpec(a.shape, lambda n, _nd=nd: (0,) * _nd)


def _pick_batch_tile(n, max_tile=8):
    for bt in range(min(n, max_tile), 0, -1):
        if n % bt == 0:
            return bt
    return 1


def _build_pallas_call(kernel, *, N, in_C, in_L, oup, hw_out, b_tile, consts, dtype):
    return pl.pallas_call(
        kernel,
        out_shape=jax.ShapeDtypeStruct((N, oup, hw_out), dtype),
        grid_spec=pltpu.PrefetchScalarGridSpec(
            num_scalar_prefetch=0,
            grid=(N // b_tile,),
            in_specs=[pl.BlockSpec((b_tile, in_C, in_L), lambda n: (n, 0, 0))]
                     + [_const_spec(a) for a in consts],
            out_specs=pl.BlockSpec((b_tile, oup, hw_out), lambda n: (n, 0, 0)),
        ),
        compiler_params=pltpu.CompilerParams(dimension_semantics=("parallel",)),
    )


def _decimation_matrix(H, W):
    """0/1 matrix S (H*W, H_out*W_out): full-res flat index -> stride-2 output index."""
    H_out, W_out = H // 2, W // 2
    q = jnp.arange(H_out * W_out)
    p = 2 * (q // W_out) * W + 2 * (q % W_out)
    return jnp.zeros((H * W, H_out * W_out), jnp.float32).at[p, q].set(1.0)


# ----------------------------------------------------------------------------- #
# Parameter setup (BN folding done here, wrapper-side) + module wrapper
# ----------------------------------------------------------------------------- #
def _rand_bn(key, c):
    k1, k2, k3, k4 = jax.random.split(key, 4)
    gamma = 1.0 + 0.1 * jax.random.normal(k1, (c,), jnp.float32)
    beta = 0.1 * jax.random.normal(k2, (c,), jnp.float32)
    mean = 0.1 * jax.random.normal(k3, (c,), jnp.float32)
    var = jnp.abs(jax.random.normal(k4, (c,), jnp.float32)) + 0.5
    scale = gamma / jnp.sqrt(var + 1e-5)
    bias = beta - mean * scale
    return scale, bias


class ShuffleV2BlockPallas:
    """JAX/Pallas port of detectron2's ShuffleV2Block (eval-mode norm, folded)."""

    def __init__(self, inp, oup, mid_channels, *, ksize, stride, key):
        assert stride in (1, 2)
        self.inp, self.oup, self.mid = inp, oup, mid_channels
        self.ksize, self.stride = ksize, stride
        outputs = oup - inp
        self.outputs = outputs
        ks = jax.random.split(key, 10)
        sc = 0.1

        # raw parameters (mirror the PyTorch module; eval-mode BN as scale/bias)
        self.w1 = sc * jax.random.normal(ks[0], (mid_channels, inp), jnp.float32)
        self.s1, self.b1 = _rand_bn(ks[1], mid_channels)
        self.wdw = sc * jax.random.normal(ks[2], (ksize, ksize, mid_channels), jnp.float32)
        self.sdw, self.bdw = _rand_bn(ks[3], mid_channels)
        self.w2 = sc * jax.random.normal(ks[4], (outputs, mid_channels), jnp.float32)
        self.s2, self.b2 = _rand_bn(ks[5], outputs)
        if stride == 2:
            self.pwdw = sc * jax.random.normal(ks[6], (ksize, ksize, inp), jnp.float32)
            self.spdw, self.bpdw = _rand_bn(ks[7], inp)
            self.pw = sc * jax.random.normal(ks[8], (inp, inp), jnp.float32)
            self.sp, self.bp = _rand_bn(ks[9], inp)

        # ---- fold BN into weights / biases (kernel-side parameters) ----
        kk = ksize * ksize
        w1s = self.w1 * self.s1[:, None]                                  # (mid, inp)
        self.w1c = w1s.astype(jnp.bfloat16)                               # MXU operand
        self.b1c = self.b1.reshape(mid_channels, 1)
        self.wdwf = (self.wdw * self.sdw[None, None, :]).reshape(kk, mid_channels)[:, :, None]
        w2t = self.w2 * self.s2[:, None]                                  # (outputs, mid)
        self.w2c = w2t.astype(jnp.bfloat16)
        self.b2f = (self.b2 + w2t @ self.bdw).reshape(outputs, 1)         # f32 fold
        if stride == 2:
            pwdwf = (self.pwdw * self.spdw[None, None, :]).reshape(kk, inp)[:, :, None]
            # one depthwise pass computes both branches: concat per-channel tap weights
            self.wdwcat = jnp.concatenate([pwdwf, self.wdwf], axis=1)     # (kk, inp+mid, 1)
            pwt = self.pw * self.sp[:, None]                              # (inp, inp)
            self.pwc = pwt.astype(jnp.bfloat16)
            self.pbf = (self.bp + pwt @ self.bpdw).reshape(inp, 1)

        self._cache = {}   # (shape, dtype) -> forward closure (kernel + S built once)

    # ---- shape-specialised forward builder (cached) ----
    def _build(self, N, C, H, W, dtype):
        HW = H * W
        bt = _pick_batch_tile(N)
        if self.stride == 1:
            assert C == 2 * self.inp and C % 4 == 0
            kernel = _make_stride1_kernel(H, W, self.ksize, self.inp, bt)
            consts = (self.w1c, self.b1c, self.wdwf, self.w2c, self.b2f)
            in_C, in_L, hw_out = C // 2, 2 * HW, HW
            out_hw = (H, W)
        else:
            assert C == self.inp and H % 2 == 0 and W % 2 == 0
            Ho, Wo = H // 2, W // 2
            S = _decimation_matrix(H, W).astype(jnp.bfloat16)             # exact 0/1
            kernel = _make_stride2_kernel(H, W, self.ksize, self.inp, bt)
            consts = (S, self.wdwcat, self.pwc, self.pbf,
                      self.w1c, self.b1c, self.w2c, self.b2f)
            in_C, in_L, hw_out = C, HW, Ho * Wo
            out_hw = (Ho, Wo)

        fn = _build_pallas_call(kernel, N=N, in_C=in_C, in_L=in_L, oup=self.oup,
                                hw_out=hw_out, b_tile=bt, consts=consts, dtype=dtype)

        def run(x_nchw):
            # free row-major metadata reshape; for stride=1 this IS the channel shuffle:
            # even channels land in lanes [:HW], odd channels in lanes [HW:].
            xf = x_nchw.reshape(N, in_C, in_L)
            out = fn(xf, *consts)
            return out.reshape(N, self.oup, *out_hw)

        return run

    def __call__(self, x_nchw):
        key = (tuple(x_nchw.shape), x_nchw.dtype)
        if key not in self._cache:
            N, C, H, W = x_nchw.shape
            self._cache[key] = self._build(N, C, H, W, x_nchw.dtype)
        return self._cache[key](x_nchw)


# ----------------------------------------------------------------------------- #
# Pure-JAX reference (unfolded conv -> BN -> ReLU order, NCHW) for validation
# ----------------------------------------------------------------------------- #
def _ref_forward(blk, x):
    hi = lax.Precision.HIGHEST

    def bn(v, s, b):
        return v * s[None, :, None, None] + b[None, :, None, None]

    def conv1x1(v, w):                                  # w: (C_out, C_in)
        return lax.conv_general_dilated(
            v, w[:, :, None, None], (1, 1), 'VALID',
            dimension_numbers=('NCHW', 'OIHW', 'NCHW'), precision=hi)

    def dwconv(v, w, stride, ksize):                    # w: (K, K, C)
        c = v.shape[1]
        pad = ksize // 2
        wr = jnp.transpose(w, (2, 0, 1))[:, None, :, :]          # (C, 1, K, K)
        return lax.conv_general_dilated(
            v, wr, (stride, stride), [(pad, pad), (pad, pad)],
            dimension_numbers=('NCHW', 'OIHW', 'NCHW'),
            feature_group_count=c, precision=hi)

    def branch_main(v):
        y = jnp.maximum(bn(conv1x1(v, blk.w1), blk.s1, blk.b1), 0.0)
        y = bn(dwconv(y, blk.wdw, blk.stride, blk.ksize), blk.sdw, blk.bdw)
        return jnp.maximum(bn(conv1x1(y, blk.w2), blk.s2, blk.b2), 0.0)

    if blk.stride == 1:
        x_proj, x_main = x[:, 0::2], x[:, 1::2]                  # channel shuffle
        return jnp.concatenate([x_proj, branch_main(x_main)], axis=1)
    else:
        y = bn(dwconv(x, blk.pwdw, 2, blk.ksize), blk.spdw, blk.bpdw)
        proj = jnp.maximum(bn(conv1x1(y, blk.pw), blk.sp, blk.bp), 0.0)
        return jnp.concatenate([proj, branch_main(x)], axis=1)


# ----------------------------------------------------------------------------- #
if __name__ == "__main__":
    key = jax.random.PRNGKey(0)
    kx1, kx2, kp1, kp2 = jax.random.split(key, 4)

    # stride=1 block: input NCHW (2, 16, 16, 16); inp=8 (=C//2), oup=16, mid=8
    blk1 = ShuffleV2BlockPallas(8, 16, 8, ksize=3, stride=1, key=kp1)
    x1 = jax.random.normal(kx1, (2, 16, 16, 16), jnp.float32)
    out1 = jax.block_until_ready(blk1(x1))
    assert out1.shape == (2, 16, 16, 16), out1.shape
    ref1 = _ref_forward(blk1, x1)
    err1 = float(jnp.max(jnp.abs(out1 - ref1)))
    assert err1 < 1e-2, err1        # bf16 MXU operands, f32 accumulation

    # stride=2 block: input NCHW (2, 8, 16, 16); inp=8, oup=24, mid=12 -> (2, 24, 8, 8)
    blk2 = ShuffleV2BlockPallas(8, 24, 12, ksize=3, stride=2, key=kp2)
    x2 = jax.random.normal(kx2, (2, 8, 16, 16), jnp.float32)
    out2 = jax.block_until_ready(blk2(x2))
    assert out2.shape == (2, 24, 8, 8), out2.shape
    ref2 = _ref_forward(blk2, x2)
    err2 = float(jnp.max(jnp.abs(out2 - ref2)))
    assert err2 < 1e-2, err2

    print("KERNEL_OK")
</pallas_src>

<mosaic_0001>
module attributes {stable_mosaic.version = 11 : i64} {
  func.func @kernel(%arg0: i32, %arg1: memref<2x8x512xf32, #tpu.memory_space<vmem>>, %arg2: memref<8x8xbf16, #tpu.memory_space<vmem>>, %arg3: memref<8x1xf32, #tpu.memory_space<vmem>>, %arg4: memref<9x8x1xf32, #tpu.memory_space<vmem>>, %arg5: memref<8x8xbf16, #tpu.memory_space<vmem>>, %arg6: memref<8x1xf32, #tpu.memory_space<vmem>>, %arg7: memref<2x16x256xf32, #tpu.memory_space<vmem>>) attributes {dimension_semantics = [#tpu.dimension_semantics<parallel>], iteration_bounds = array<i64: 1>, scalar_prefetch = 0 : i64, scratch_operands = 0 : i64, tpu.core_type = #tpu.core_type<tc>, window_params = [{transform_indices = @transform_0, window_bounds = array<i64: 2, 8, 512>}, {pipeline_mode = #tpu.pipeline_mode<synchronous>, transform_indices = @transform_1, window_bounds = array<i64: 8, 8>}, {pipeline_mode = #tpu.pipeline_mode<synchronous>, transform_indices = @transform_2, window_bounds = array<i64: 8, 1>}, {pipeline_mode = #tpu.pipeline_mode<synchronous>, transform_indices = @transform_3, window_bounds = array<i64: 9, 8, 1>}, {pipeline_mode = #tpu.pipeline_mode<synchronous>, transform_indices = @transform_4, window_bounds = array<i64: 8, 8>}, {pipeline_mode = #tpu.pipeline_mode<synchronous>, transform_indices = @transform_5, window_bounds = array<i64: 8, 1>}, {transform_indices = @transform_6, window_bounds = array<i64: 2, 16, 256>}]} {
    %c0 = arith.constant 0 : index
    %c0_0 = arith.constant 0 : index
    %0 = vector.load %arg2[%c0, %c0_0] : memref<8x8xbf16, #tpu.memory_space<vmem>>, vector<8x8xbf16>
    %c0_1 = arith.constant 0 : index
    %c0_2 = arith.constant 0 : index
    %1 = vector.load %arg3[%c0_1, %c0_2] : memref<8x1xf32, #tpu.memory_space<vmem>>, vector<8x1xf32>
    %c0_3 = arith.constant 0 : index
    %c0_4 = arith.constant 0 : index
    %c0_5 = arith.constant 0 : index
    %2 = vector.load %arg4[%c0_3, %c0_4, %c0_5] : memref<9x8x1xf32, #tpu.memory_space<vmem>>, vector<9x8x1xf32>
    %c0_6 = arith.constant 0 : index
    %c0_7 = arith.constant 0 : index
    %3 = vector.load %arg5[%c0_6, %c0_7] : memref<8x8xbf16, #tpu.memory_space<vmem>>, vector<8x8xbf16>
    %c0_8 = arith.constant 0 : index
    %c0_9 = arith.constant 0 : index
    %4 = vector.load %arg6[%c0_8, %c0_9] : memref<8x1xf32, #tpu.memory_space<vmem>>, vector<8x1xf32>
    %5 = tpu.iota {dimensions = array<i32: 1>} : vector<1x256xi32>
    %c16_i32 = arith.constant 16 : i32
    %c0_i32 = arith.constant 0 : i32
    %6 = arith.cmpi eq, %c16_i32, %c0_i32 : i32
    %c1_i32 = arith.constant 1 : i32
    %7 = arith.select %6, %c1_i32, %c16_i32 : i32
    %8 = vector.broadcast %7 : i32 to vector<1x256xi32>
    %9 = arith.remsi %5, %8 : vector<1x256xi32>
    %c0_i32_10 = arith.constant 0 : i32
    %10 = vector.broadcast %c0_i32_10 : i32 to vector<1x256xi32>
    %11 = arith.cmpi ne, %9, %10 : vector<1x256xi32>
    %c0_i32_11 = arith.constant 0 : i32
    %12 = vector.broadcast %c0_i32_11 : i32 to vector<1x256xi32>
    %13 = arith.cmpi slt, %9, %12 : vector<1x256xi32>
    %c0_i32_12 = arith.constant 0 : i32
    %14 = arith.cmpi slt, %7, %c0_i32_12 : i32
    %15 = vector.broadcast %14 : i1 to vector<1x256xi1>
    %16 = vector.broadcast %15 : vector<1x256xi1> to vector<1x256xi1>
    %17 = arith.xori %13, %16 : vector<1x256xi1>
    %18 = arith.andi %17, %11 : vector<1x256xi1>
    %19 = vector.broadcast %7 : i32 to vector<1x256xi32>
    %20 = arith.addi %9, %19 : vector<1x256xi32>
    %21 = arith.select %18, %20, %9 : vector<1x256xi1>, vector<1x256xi32>
    %c-16_i32 = arith.constant -16 : i32
    %22 = vector.broadcast %c-16_i32 : i32 to vector<1x256xi32>
    %23 = arith.addi %5, %22 : vector<1x256xi32>
    %c0_i32_13 = arith.constant 0 : i32
    %24 = vector.broadcast %c0_i32_13 : i32 to vector<1x256xi32>
    %25 = arith.cmpi sge, %23, %24 : vector<1x256xi32>
    %c-16_i32_14 = arith.constant -16 : i32
    %26 = vector.broadcast %c-16_i32_14 : i32 to vector<1x256xi32>
    %27 = arith.addi %5, %26 : vector<1x256xi32>
    %c256_i32 = arith.constant 256 : i32
    %28 = vector.broadcast %c256_i32 : i32 to vector<1x256xi32>
    %29 = arith.cmpi slt, %27, %28 : vector<1x256xi32>
    %30 = arith.andi %25, %29 : vector<1x256xi1>
    %c-1_i32 = arith.constant -1 : i32
    %31 = vector.broadcast %c-1_i32 : i32 to vector<1x256xi32>
    %32 = arith.addi %21, %31 : vector<1x256xi32>
    %c0_i32_15 = arith.constant 0 : i32
    %33 = vector.broadcast %c0_i32_15 : i32 to vector<1x256xi32>
    %34 = arith.cmpi sge, %32, %33 : vector<1x256xi32>
    %c-1_i32_16 = arith.constant -1 : i32
    %35 = vector.broadcast %c-1_i32_16 : i32 to vector<1x256xi32>
    %36 = arith.addi %21, %35 : vector<1x256xi32>
    %c16_i32_17 = arith.constant 16 : i32
    %37 = vector.broadcast %c16_i32_17 : i32 to vector<1x256xi32>
    %38 = arith.cmpi slt, %36, %37 : vector<1x256xi32>
    %39 = arith.andi %34, %38 : vector<1x256xi1>
    %40 = arith.andi %30, %39 : vector<1x256xi1>
    %41 = arith.extui %40 : vector<1x256xi1> to vector<1x256xi32>
    %42 = arith.sitofp %41 : vector<1x256xi32> to vector<1x256xf32>
    %c-16_i32_18 = arith.constant -16 : i32
    %43 = vector.broadcast %c-16_i32_18 : i32 to vector<1x256xi32>
    %44 = arith.addi %5, %43 : vector<1x256xi32>
    %c0_i32_19 = arith.constant 0 : i32
    %45 = vector.broadcast %c0_i32_19 : i32 to vector<1x256xi32>
    %46 = arith.cmpi sge, %44, %45 : vector<1x256xi32>
    %c-16_i32_20 = arith.constant -16 : i32
    %47 = vector.broadcast %c-16_i32_20 : i32 to vector<1x256xi32>
    %48 = arith.addi %5, %47 : vector<1x256xi32>
    %c256_i32_21 = arith.constant 256 : i32
    %49 = vector.broadcast %c256_i32_21 : i32 to vector<1x256xi32>
    %50 = arith.cmpi slt, %48, %49 : vector<1x256xi32>
    %51 = arith.andi %46, %50 : vector<1x256xi1>
    %c0_i32_22 = arith.constant 0 : i32
    %52 = vector.broadcast %c0_i32_22 : i32 to vector<1x256xi32>
    %53 = arith.addi %21, %52 : vector<1x256xi32>
    %c0_i32_23 = arith.constant 0 : i32
    %54 = vector.broadcast %c0_i32_23 : i32 to vector<1x256xi32>
    %55 = arith.cmpi sge, %53, %54 : vector<1x256xi32>
    %c0_i32_24 = arith.constant 0 : i32
    %56 = vector.broadcast %c0_i32_24 : i32 to vector<1x256xi32>
    %57 = arith.addi %21, %56 : vector<1x256xi32>
    %c16_i32_25 = arith.constant 16 : i32
    %58 = vector.broadcast %c16_i32_25 : i32 to vector<1x256xi32>
    %59 = arith.cmpi slt, %57, %58 : vector<1x256xi32>
    %60 = arith.andi %55, %59 : vector<1x256xi1>
    %61 = arith.andi %51, %60 : vector<1x256xi1>
    %62 = arith.extui %61 : vector<1x256xi1> to vector<1x256xi32>
    %63 = arith.sitofp %62 : vector<1x256xi32> to vector<1x256xf32>
    %c-16_i32_26 = arith.constant -16 : i32
    %64 = vector.broadcast %c-16_i32_26 : i32 to vector<1x256xi32>
    %65 = arith.addi %5, %64 : vector<1x256xi32>
    %c0_i32_27 = arith.constant 0 : i32
    %66 = vector.broadcast %c0_i32_27 : i32 to vector<1x256xi32>
    %67 = arith.cmpi sge, %65, %66 : vector<1x256xi32>
    %c-16_i32_28 = arith.constant -16 : i32
    %68 = vector.broadcast %c-16_i32_28 : i32 to vector<1x256xi32>
    %69 = arith.addi %5, %68 : vector<1x256xi32>
    %c256_i32_29 = arith.constant 256 : i32
    %70 = vector.broadcast %c256_i32_29 : i32 to vector<1x256xi32>
    %71 = arith.cmpi slt, %69, %70 : vector<1x256xi32>
    %72 = arith.andi %67, %71 : vector<1x256xi1>
    %c1_i32_30 = arith.constant 1 : i32
    %73 = vector.broadcast %c1_i32_30 : i32 to vector<1x256xi32>
    %74 = arith.addi %21, %73 : vector<1x256xi32>
    %c0_i32_31 = arith.constant 0 : i32
    %75 = vector.broadcast %c0_i32_31 : i32 to vector<1x256xi32>
    %76 = arith.cmpi sge, %74, %75 : vector<1x256xi32>
    %c1_i32_32 = arith.constant 1 : i32
    %77 = vector.broadcast %c1_i32_32 : i32 to vector<1x256xi32>
    %78 = arith.addi %21, %77 : vector<1x256xi32>
    %c16_i32_33 = arith.constant 16 : i32
    %79 = vector.broadcast %c16_i32_33 : i32 to vector<1x256xi32>
    %80 = arith.cmpi slt, %78, %79 : vector<1x256xi32>
    %81 = arith.andi %76, %80 : vector<1x256xi1>
    %82 = arith.andi %72, %81 : vector<1x256xi1>
    %83 = arith.extui %82 : vector<1x256xi1> to vector<1x256xi32>
    %84 = arith.sitofp %83 : vector<1x256xi32> to vector<1x256xf32>
    %c0_i32_34 = arith.constant 0 : i32
    %85 = vector.broadcast %c0_i32_34 : i32 to vector<1x256xi32>
    %86 = arith.addi %5, %85 : vector<1x256xi32>
    %c0_i32_35 = arith.constant 0 : i32
    %87 = vector.broadcast %c0_i32_35 : i32 to vector<1x256xi32>
    %88 = arith.cmpi sge, %86, %87 : vector<1x256xi32>
    %c0_i32_36 = arith.constant 0 : i32
    %89 = vector.broadcast %c0_i32_36 : i32 to vector<1x256xi32>
    %90 = arith.addi %5, %89 : vector<1x256xi32>
    %c256_i32_37 = arith.constant 256 : i32
    %91 = vector.broadcast %c256_i32_37 : i32 to vector<1x256xi32>
    %92 = arith.cmpi slt, %90, %91 : vector<1x256xi32>
    %93 = arith.andi %88, %92 : vector<1x256xi1>
    %c-1_i32_38 = arith.constant -1 : i32
    %94 = vector.broadcast %c-1_i32_38 : i32 to vector<1x256xi32>
    %95 = arith.addi %21, %94 : vector<1x256xi32>
    %c0_i32_39 = arith.constant 0 : i32
    %96 = vector.broadcast %c0_i32_39 : i32 to vector<1x256xi32>
    %97 = arith.cmpi sge, %95, %96 : vector<1x256xi32>
    %c-1_i32_40 = arith.constant -1 : i32
    %98 = vector.broadcast %c-1_i32_40 : i32 to vector<1x256xi32>
    %99 = arith.addi %21, %98 : vector<1x256xi32>
    %c16_i32_41 = arith.constant 16 : i32
    %100 = vector.broadcast %c16_i32_41 : i32 to vector<1x256xi32>
    %101 = arith.cmpi slt, %99, %100 : vector<1x256xi32>
    %102 = arith.andi %97, %101 : vector<1x256xi1>
    %103 = arith.andi %93, %102 : vector<1x256xi1>
    %104 = arith.extui %103 : vector<1x256xi1> to vector<1x256xi32>
    %105 = arith.sitofp %104 : vector<1x256xi32> to vector<1x256xf32>
    %c0_i32_42 = arith.constant 0 : i32
    %106 = vector.broadcast %c0_i32_42 : i32 to vector<1x256xi32>
    %107 = arith.addi %5, %106 : vector<1x256xi32>
    %c0_i32_43 = arith.constant 0 : i32
    %108 = vector.broadcast %c0_i32_43 : i32 to vector<1x256xi32>
    %109 = arith.cmpi sge, %107, %108 : vector<1x256xi32>
    %c0_i32_44 = arith.constant 0 : i32
    %110 = vector.broadcast %c0_i32_44 : i32 to vector<1x256xi32>
    %111 = arith.addi %5, %110 : vector<1x256xi32>
    %c256_i32_45 = arith.constant 256 : i32
    %112 = vector.broadcast %c256_i32_45 : i32 to vector<1x256xi32>
    %113 = arith.cmpi slt, %111, %112 : vector<1x256xi32>
    %114 = arith.andi %109, %113 : vector<1x256xi1>
    %c1_i32_46 = arith.constant 1 : i32
    %115 = vector.broadcast %c1_i32_46 : i32 to vector<1x256xi32>
    %116 = arith.addi %21, %115 : vector<1x256xi32>
    %c0_i32_47 = arith.constant 0 : i32
    %117 = vector.broadcast %c0_i32_47 : i32 to vector<1x256xi32>
    %118 = arith.cmpi sge, %116, %117 : vector<1x256xi32>
    %c1_i32_48 = arith.constant 1 : i32
    %119 = vector.broadcast %c1_i32_48 : i32 to vector<1x256xi32>
    %120 = arith.addi %21, %119 : vector<1x256xi32>
    %c16_i32_49 = arith.constant 16 : i32
    %121 = vector.broadcast %c16_i32_49 : i32 to vector<1x256xi32>
    %122 = arith.cmpi slt, %120, %121 : vector<1x256xi32>
    %123 = arith.andi %118, %122 : vector<1x256xi1>
    %124 = arith.andi %114, %123 : vector<1x256xi1>
    %125 = arith.extui %124 : vector<1x256xi1> to vector<1x256xi32>
    %126 = arith.sitofp %125 : vector<1x256xi32> to vector<1x256xf32>
    %c16_i32_50 = arith.constant 16 : i32
    %127 = vector.broadcast %c16_i32_50 : i32 to vector<1x256xi32>
    %128 = arith.addi %5, %127 : vector<1x256xi32>
    %c0_i32_51 = arith.constant 0 : i32
    %129 = vector.broadcast %c0_i32_51 : i32 to vector<1x256xi32>
    %130 = arith.cmpi sge, %128, %129 : vector<1x256xi32>
    %c16_i32_52 = arith.constant 16 : i32
    %131 = vector.broadcast %c16_i32_52 : i32 to vector<1x256xi32>
    %132 = arith.addi %5, %131 : vector<1x256xi32>
    %c256_i32_53 = arith.constant 256 : i32
    %133 = vector.broadcast %c256_i32_53 : i32 to vector<1x256xi32>
    %134 = arith.cmpi slt, %132, %133 : vector<1x256xi32>
    %135 = arith.andi %130, %134 : vector<1x256xi1>
    %c-1_i32_54 = arith.constant -1 : i32
    %136 = vector.broadcast %c-1_i32_54 : i32 to vector<1x256xi32>
    %137 = arith.addi %21, %136 : vector<1x256xi32>
    %c0_i32_55 = arith.constant 0 : i32
    %138 = vector.broadcast %c0_i32_55 : i32 to vector<1x256xi32>
    %139 = arith.cmpi sge, %137, %138 : vector<1x256xi32>
    %c-1_i32_56 = arith.constant -1 : i32
    %140 = vector.broadcast %c-1_i32_56 : i32 to vector<1x256xi32>
    %141 = arith.addi %21, %140 : vector<1x256xi32>
    %c16_i32_57 = arith.constant 16 : i32
    %142 = vector.broadcast %c16_i32_57 : i32 to vector<1x256xi32>
    %143 = arith.cmpi slt, %141, %142 : vector<1x256xi32>
    %144 = arith.andi %139, %143 : vector<1x256xi1>
    %145 = arith.andi %135, %144 : vector<1x256xi1>
    %146 = arith.extui %145 : vector<1x256xi1> to vector<1x256xi32>
    %147 = arith.sitofp %146 : vector<1x256xi32> to vector<1x256xf32>
    %c16_i32_58 = arith.constant 16 : i32
    %148 = vector.broadcast %c16_i32_58 : i32 to vector<1x256xi32>
    %149 = arith.addi %5, %148 : vector<1x256xi32>
    %c0_i32_59 = arith.constant 0 : i32
    %150 = vector.broadcast %c0_i32_59 : i32 to vector<1x256xi32>
    %151 = arith.cmpi sge, %149, %150 : vector<1x256xi32>
    %c16_i32_60 = arith.constant 16 : i32
    %152 = vector.broadcast %c16_i32_60 : i32 to vector<1x256xi32>
    %153 = arith.addi %5, %152 : vector<1x256xi32>
    %c256_i32_61 = arith.constant 256 : i32
    %154 = vector.broadcast %c256_i32_61 : i32 to vector<1x256xi32>
    %155 = arith.cmpi slt, %153, %154 : vector<1x256xi32>
    %156 = arith.andi %151, %155 : vector<1x256xi1>
    %c0_i32_62 = arith.constant 0 : i32
    %157 = vector.broadcast %c0_i32_62 : i32 to vector<1x256xi32>
    %158 = arith.addi %21, %157 : vector<1x256xi32>
    %c0_i32_63 = arith.constant 0 : i32
    %159 = vector.broadcast %c0_i32_63 : i32 to vector<1x256xi32>
    %160 = arith.cmpi sge, %158, %159 : vector<1x256xi32>
    %c0_i32_64 = arith.constant 0 : i32
    %161 = vector.broadcast %c0_i32_64 : i32 to vector<1x256xi32>
    %162 = arith.addi %21, %161 : vector<1x256xi32>
    %c16_i32_65 = arith.constant 16 : i32
    %163 = vector.broadcast %c16_i32_65 : i32 to vector<1x256xi32>
    %164 = arith.cmpi slt, %162, %163 : vector<1x256xi32>
    %165 = arith.andi %160, %164 : vector<1x256xi1>
    %166 = arith.andi %156, %165 : vector<1x256xi1>
    %167 = arith.extui %166 : vector<1x256xi1> to vector<1x256xi32>
    %168 = arith.sitofp %167 : vector<1x256xi32> to vector<1x256xf32>
    %c16_i32_66 = arith.constant 16 : i32
    %169 = vector.broadcast %c16_i32_66 : i32 to vector<1x256xi32>
    %170 = arith.addi %5, %169 : vector<1x256xi32>
    %c0_i32_67 = arith.constant 0 : i32
    %171 = vector.broadcast %c0_i32_67 : i32 to vector<1x256xi32>
    %172 = arith.cmpi sge, %170, %171 : vector<1x256xi32>
    %c16_i32_68 = arith.constant 16 : i32
    %173 = vector.broadcast %c16_i32_68 : i32 to vector<1x256xi32>
    %174 = arith.addi %5, %173 : vector<1x256xi32>
    %c256_i32_69 = arith.constant 256 : i32
    %175 = vector.broadcast %c256_i32_69 : i32 to vector<1x256xi32>
    %176 = arith.cmpi slt, %174, %175 : vector<1x256xi32>
    %177 = arith.andi %172, %176 : vector<1x256xi1>
    %c1_i32_70 = arith.constant 1 : i32
    %178 = vector.broadcast %c1_i32_70 : i32 to vector<1x256xi32>
    %179 = arith.addi %21, %178 : vector<1x256xi32>
    %c0_i32_71 = arith.constant 0 : i32
    %180 = vector.broadcast %c0_i32_71 : i32 to vector<1x256xi32>
    %181 = arith.cmpi sge, %179, %180 : vector<1x256xi32>
    %c1_i32_72 = arith.constant 1 : i32
    %182 = vector.broadcast %c1_i32_72 : i32 to vector<1x256xi32>
    %183 = arith.addi %21, %182 : vector<1x256xi32>
    %c16_i32_73 = arith.constant 16 : i32
    %184 = vector.broadcast %c16_i32_73 : i32 to vector<1x256xi32>
    %185 = arith.cmpi slt, %183, %184 : vector<1x256xi32>
    %186 = arith.andi %181, %185 : vector<1x256xi1>
    %187 = arith.andi %177, %186 : vector<1x256xi1>
    %188 = arith.extui %187 : vector<1x256xi1> to vector<1x256xi32>
    %189 = arith.sitofp %188 : vector<1x256xi32> to vector<1x256xf32>
    %c0_74 = arith.constant 0 : index
    %c0_75 = arith.constant 0 : index
    %c0_76 = arith.constant 0 : index
    %190 = vector.load %arg1[%c0_74, %c0_75, %c0_76] : memref<2x8x512xf32, #tpu.memory_space<vmem>>, vector<1x8x512xf32>
    %191 = vector.shape_cast %190 : vector<1x8x512xf32> to vector<8x512xf32>
    %192 = vector.extract_strided_slice %191 {offsets = [0, 0], sizes = [8, 256], strides = [1, 1]} : vector<8x512xf32> to vector<8x256xf32>
    %193 = vector.extract_strided_slice %191 {offsets = [0, 256], sizes = [8, 256], strides = [1, 1]} : vector<8x512xf32> to vector<8x256xf32>
    %194 = arith.truncf %193 : vector<8x256xf32> to vector<8x256xbf16>
    %cst = arith.constant dense<0.000000e+00> : vector<8x256xf32>
    %195 = tpu.matmul %0, %194, %cst {dimension_numbers = #tpu.dot_dimension_numbers<[1], [0], [0], [1], [0, 0, 1, 1], [], []>} : vector<8x8xbf16>, vector<8x256xbf16>, vector<8x256xf32> -> vector<8x256xf32>
    %196 = vector.broadcast %1 : vector<8x1xf32> to vector<8x256xf32>
    %197 = arith.addf %195, %196 : vector<8x256xf32>
    %cst_77 = arith.constant 0.000000e+00 : f32
    %198 = vector.broadcast %cst_77 : f32 to vector<8x256xf32>
    %199 = arith.maximumf %197, %198 : vector<8x256xf32>
    %c17_i32 = arith.constant 17 : i32
    %200 = tpu.dynamic_rotate %199 by %c17_i32 dim 1 : vector<8x256xf32>, i32 -> vector<8x256xf32>
    %201 = vector.broadcast %42 : vector<1x256xf32> to vector<8x256xf32>
    %202 = arith.mulf %200, %201 : vector<8x256xf32>
    %203 = vector.extract_strided_slice %2 {offsets = [0, 0, 0], sizes = [1, 8, 1], strides = [1, 1, 1]} : vector<9x8x1xf32> to vector<1x8x1xf32>
    %204 = vector.shape_cast %203 : vector<1x8x1xf32> to vector<8x1xf32>
    %205 = vector.broadcast %204 : vector<8x1xf32> to vector<8x256xf32>
    %206 = arith.mulf %202, %205 : vector<8x256xf32>
    %c16_i32_78 = arith.constant 16 : i32
    %207 = tpu.dynamic_rotate %199 by %c16_i32_78 dim 1 : vector<8x256xf32>, i32 -> vector<8x256xf32>
    %208 = vector.broadcast %63 : vector<1x256xf32> to vector<8x256xf32>
    %209 = arith.mulf %207, %208 : vector<8x256xf32>
    %210 = vector.extract_strided_slice %2 {offsets = [1, 0, 0], sizes = [1, 8, 1], strides = [1, 1, 1]} : vector<9x8x1xf32> to vector<1x8x1xf32>
    %211 = vector.shape_cast %210 : vector<1x8x1xf32> to vector<8x1xf32>
    %212 = vector.broadcast %211 : vector<8x1xf32> to vector<8x256xf32>
    %213 = arith.mulf %209, %212 : vector<8x256xf32>
    %214 = arith.addf %206, %213 : vector<8x256xf32>
    %c15_i32 = arith.constant 15 : i32
    %215 = tpu.dynamic_rotate %199 by %c15_i32 dim 1 : vector<8x256xf32>, i32 -> vector<8x256xf32>
    %216 = vector.broadcast %84 : vector<1x256xf32> to vector<8x256xf32>
    %217 = arith.mulf %215, %216 : vector<8x256xf32>
    %218 = vector.extract_strided_slice %2 {offsets = [2, 0, 0], sizes = [1, 8, 1], strides = [1, 1, 1]} : vector<9x8x1xf32> to vector<1x8x1xf32>
    %219 = vector.shape_cast %218 : vector<1x8x1xf32> to vector<8x1xf32>
    %220 = vector.broadcast %219 : vector<8x1xf32> to vector<8x256xf32>
    %221 = arith.mulf %217, %220 : vector<8x256xf32>
    %222 = arith.addf %214, %221 : vector<8x256xf32>
    %c1_i32_79 = arith.constant 1 : i32
    %223 = tpu.dynamic_rotate %199 by %c1_i32_79 dim 1 : vector<8x256xf32>, i32 -> vector<8x256xf32>
    %224 = vector.broadcast %105 : vector<1x256xf32> to vector<8x256xf32>
    %225 = arith.mulf %223, %224 : vector<8x256xf32>
    %226 = vector.extract_strided_slice %2 {offsets = [3, 0, 0], sizes = [1, 8, 1], strides = [1, 1, 1]} : vector<9x8x1xf32> to vector<1x8x1xf32>
    %227 = vector.shape_cast %226 : vector<1x8x1xf32> to vector<8x1xf32>
    %228 = vector.broadcast %227 : vector<8x1xf32> to vector<8x256xf32>
    %229 = arith.mulf %225, %228 : vector<8x256xf32>
    %230 = arith.addf %222, %229 : vector<8x256xf32>
    %231 = vector.extract_strided_slice %2 {offsets = [4, 0, 0], sizes = [1, 8, 1], strides = [1, 1, 1]} : vector<9x8x1xf32> to vector<1x8x1xf32>
    %232 = vector.shape_cast %231 : vector<1x8x1xf32> to vector<8x1xf32>
    %233 = vector.broadcast %232 : vector<8x1xf32> to vector<8x256xf32>
    %234 = arith.mulf %199, %233 : vector<8x256xf32>
    %235 = arith.addf %230, %234 : vector<8x256xf32>
    %c255_i32 = arith.constant 255 : i32
    %236 = tpu.dynamic_rotate %199 by %c255_i32 dim 1 : vector<8x256xf32>, i32 -> vector<8x256xf32>
    %237 = vector.broadcast %126 : vector<1x256xf32> to vector<8x256xf32>
    %238 = arith.mulf %236, %237 : vector<8x256xf32>
    %239 = vector.extract_strided_slice %2 {offsets = [5, 0, 0], sizes = [1, 8, 1], strides = [1, 1, 1]} : vector<9x8x1xf32> to vector<1x8x1xf32>
    %240 = vector.shape_cast %239 : vector<1x8x1xf32> to vector<8x1xf32>
    %241 = vector.broadcast %240 : vector<8x1xf32> to vector<8x256xf32>
    %242 = arith.mulf %238, %241 : vector<8x256xf32>
    %243 = arith.addf %235, %242 : vector<8x256xf32>
    %c241_i32 = arith.constant 241 : i32
    %244 = tpu.dynamic_rotate %199 by %c241_i32 dim 1 : vector<8x256xf32>, i32 -> vector<8x256xf32>
    %245 = vector.broadcast %147 : vector<1x256xf32> to vector<8x256xf32>
    %246 = arith.mulf %244, %245 : vector<8x256xf32>
    %247 = vector.extract_strided_slice %2 {offsets = [6, 0, 0], sizes = [1, 8, 1], strides = [1, 1, 1]} : vector<9x8x1xf32> to vector<1x8x1xf32>
    %248 = vector.shape_cast %247 : vector<1x8x1xf32> to vector<8x1xf32>
    %249 = vector.broadcast %248 : vector<8x1xf32> to vector<8x256xf32>
    %250 = arith.mulf %246, %249 : vector<8x256xf32>
    %251 = arith.addf %243, %250 : vector<8x256xf32>
    %c240_i32 = arith.constant 240 : i32
    %252 = tpu.dynamic_rotate %199 by %c240_i32 dim 1 : vector<8x256xf32>, i32 -> vector<8x256xf32>
    %253 = vector.broadcast %168 : vector<1x256xf32> to vector<8x256xf32>
    %254 = arith.mulf %252, %253 : vector<8x256xf32>
    %255 = vector.extract_strided_slice %2 {offsets = [7, 0, 0], sizes = [1, 8, 1], strides = [1, 1, 1]} : vector<9x8x1xf32> to vector<1x8x1xf32>
    %256 = vector.shape_cast %255 : vector<1x8x1xf32> to vector<8x1xf32>
    %257 = vector.broadcast %256 : vector<8x1xf32> to vector<8x256xf32>
    %258 = arith.mulf %254, %257 : vector<8x256xf32>
    %259 = arith.addf %251, %258 : vector<8x256xf32>
    %c239_i32 = arith.constant 239 : i32
    %260 = tpu.dynamic_rotate %199 by %c239_i32 dim 1 : vector<8x256xf32>, i32 -> vector<8x256xf32>
    %261 = vector.broadcast %189 : vector<1x256xf32> to vector<8x256xf32>
    %262 = arith.mulf %260, %261 : vector<8x256xf32>
    %263 = vector.extract_strided_slice %2 {offsets = [8, 0, 0], sizes = [1, 8, 1], strides = [1, 1, 1]} : vector<9x8x1xf32> to vector<1x8x1xf32>
    %264 = vector.shape_cast %263 : vector<1x8x1xf32> to vector<8x1xf32>
    %265 = vector.broadcast %264 : vector<8x1xf32> to vector<8x256xf32>
    %266 = arith.mulf %262, %265 : vector<8x256xf32>
    %267 = arith.addf %259, %266 : vector<8x256xf32>
    %268 = arith.truncf %267 : vector<8x256xf32> to vector<8x256xbf16>
    %cst_80 = arith.constant dense<0.000000e+00> : vector<8x256xf32>
    %269 = tpu.matmul %3, %268, %cst_80 {dimension_numbers = #tpu.dot_dimension_numbers<[1], [0], [0], [1], [0, 0, 1, 1], [], []>} : vector<8x8xbf16>, vector<8x256xbf16>, vector<8x256xf32> -> vector<8x256xf32>
    %270 = vector.broadcast %4 : vector<8x1xf32> to vector<8x256xf32>
    %271 = arith.addf %269, %270 : vector<8x256xf32>
    %cst_81 = arith.constant 0.000000e+00 : f32
    %272 = vector.broadcast %cst_81 : f32 to vector<8x256xf32>
    %273 = arith.maximumf %271, %272 : vector<8x256xf32>
    %c0_82 = arith.constant 0 : index
    %c0_83 = arith.constant 0 : index
    %c0_84 = arith.constant 0 : index
    %274 = vector.load %arg7[%c0_82, %c0_83, %c0_84] : memref<2x16x256xf32, #tpu.memory_space<vmem>>, vector<1x8x256xf32>
    %275 = vector.shape_cast %274 : vector<1x8x256xf32> to vector<8x256xf32>
    %276 = vector.shape_cast %192 : vector<8x256xf32> to vector<1x8x256xf32>
    tpu.vector_store %arg7[%c0_82, %c0_83, %c0_84], %276 {strides = array<i32>} : memref<2x16x256xf32, #tpu.memory_space<vmem>>, vector<1x8x256xf32>,
    %c0_85 = arith.constant 0 : index
    %c8 = arith.constant 8 : index
    %c0_86 = arith.constant 0 : index
    %277 = vector.load %arg7[%c0_85, %c8, %c0_86] : memref<2x16x256xf32, #tpu.memory_space<vmem>>, vector<1x8x256xf32>
    %278 = vector.shape_cast %277 : vector<1x8x256xf32> to vector<8x256xf32>
    %279 = vector.shape_cast %273 : vector<8x256xf32> to vector<1x8x256xf32>
    tpu.vector_store %arg7[%c0_85, %c8, %c0_86], %279 {strides = array<i32>} : memref<2x16x256xf32, #tpu.memory_space<vmem>>, vector<1x8x256xf32>,
    %c1 = arith.constant 1 : index
    %c0_87 = arith.constant 0 : index
    %c0_88 = arith.constant 0 : index
    %280 = vector.load %arg1[%c1, %c0_87, %c0_88] : memref<2x8x512xf32, #tpu.memory_space<vmem>>, vector<1x8x512xf32>
    %281 = vector.shape_cast %280 : vector<1x8x512xf32> to vector<8x512xf32>
    %282 = vector.extract_strided_slice %281 {offsets = [0, 0], sizes = [8, 256], strides = [1, 1]} : vector<8x512xf32> to vector<8x256xf32>
    %283 = vector.extract_strided_slice %281 {offsets = [0, 256], sizes = [8, 256], strides = [1, 1]} : vector<8x512xf32> to vector<8x256xf32>
    %284 = arith.truncf %283 : vector<8x256xf32> to vector<8x256xbf16>
    %cst_89 = arith.constant dense<0.000000e+00> : vector<8x256xf32>
    %285 = tpu.matmul %0, %284, %cst_89 {dimension_numbers = #tpu.dot_dimension_numbers<[1], [0], [0], [1], [0, 0, 1, 1], [], []>} : vector<8x8xbf16>, vector<8x256xbf16>, vector<8x256xf32> -> vector<8x256xf32>
    %286 = vector.broadcast %1 : vector<8x1xf32> to vector<8x256xf32>
    %287 = arith.addf %285, %286 : vector<8x256xf32>
    %cst_90 = arith.constant 0.000000e+00 : f32
    %288 = vector.broadcast %cst_90 : f32 to vector<8x256xf32>
    %289 = arith.maximumf %287, %288 : vector<8x256xf32>
    %c17_i32_91 = arith.constant 17 : i32
    %290 = tpu.dynamic_rotate %289 by %c17_i32_91 dim 1 : vector<8x256xf32>, i32 -> vector<8x256xf32>
    %291 = vector.broadcast %42 : vector<1x256xf32> to vector<8x256xf32>
    %292 = arith.mulf %290, %291 : vector<8x256xf32>
    %293 = vector.extract_strided_slice %2 {offsets = [0, 0, 0], sizes = [1, 8, 1], strides = [1, 1, 1]} : vector<9x8x1xf32> to vector<1x8x1xf32>
    %294 = vector.shape_cast %293 : vector<1x8x1xf32> to vector<8x1xf32>
    %295 = vector.broadcast %294 : vector<8x1xf32> to vector<8x256xf32>
    %296 = arith.mulf %292, %295 : vector<8x256xf32>
    %c16_i32_92 = arith.constant 16 : i32
    %297 = tpu.dynamic_rotate %289 by %c16_i32_92 dim 1 : vector<8x256xf32>, i32 -> vector<8x256xf32>
    %298 = vector.broadcast %63 : vector<1x256xf32> to vector<8x256xf32>
    %299 = arith.mulf %297, %298 : vector<8x256xf32>
    %300 = vector.extract_strided_slice %2 {offsets = [1, 0, 0], sizes = [1, 8, 1], strides = [1, 1, 1]} : vector<9x8x1xf32> to vector<1x8x1xf32>
    %301 = vector.shape_cast %300 : vector<1x8x1xf32> to vector<8x1xf32>
    %302 = vector.broadcast %301 : vector<8x1xf32> to vector<8x256xf32>
    %303 = arith.mulf %299, %302 : vector<8x256xf32>
    %304 = arith.addf %296, %303 : vector<8x256xf32>
    %c15_i32_93 = arith.constant 15 : i32
    %305 = tpu.dynamic_rotate %289 by %c15_i32_93 dim 1 : vector<8x256xf32>, i32 -> vector<8x256xf32>
    %306 = vector.broadcast %84 : vector<1x256xf32> to vector<8x256xf32>
    %307 = arith.mulf %305, %306 : vector<8x256xf32>
    %308 = vector.extract_strided_slice %2 {offsets = [2, 0, 0], sizes = [1, 8, 1], strides = [1, 1, 1]} : vector<9x8x1xf32> to vector<1x8x1xf32>
    %309 = vector.shape_cast %308 : vector<1x8x1xf32> to vector<8x1xf32>
    %310 = vector.broadcast %309 : vector<8x1xf32> to vector<8x256xf32>
    %311 = arith.mulf %307, %310 : vector<8x256xf32>
    %312 = arith.addf %304, %311 : vector<8x256xf32>
    %c1_i32_94 = arith.constant 1 : i32
    %313 = tpu.dynamic_rotate %289 by %c1_i32_94 dim 1 : vector<8x256xf32>, i32 -> vector<8x256xf32>
    %314 = vector.broadcast %105 : vector<1x256xf32> to vector<8x256xf32>
    %315 = arith.mulf %313, %314 : vector<8x256xf32>
    %316 = vector.extract_strided_slice %2 {offsets = [3, 0, 0], sizes = [1, 8, 1], strides = [1, 1, 1]} : vector<9x8x1xf32> to vector<1x8x1xf32>
    %317 = vector.shape_cast %316 : vector<1x8x1xf32> to vector<8x1xf32>
    %318 = vector.broadcast %317 : vector<8x1xf32> to vector<8x256xf32>
    %319 = arith.mulf %315, %318 : vector<8x256xf32>
    %320 = arith.addf %312, %319 : vector<8x256xf32>
    %321 = vector.extract_strided_slice %2 {offsets = [4, 0, 0], sizes = [1, 8, 1], strides = [1, 1, 1]} : vector<9x8x1xf32> to vector<1x8x1xf32>
    %322 = vector.shape_cast %321 : vector<1x8x1xf32> to vector<8x1xf32>
    %323 = vector.broadcast %322 : vector<8x1xf32> to vector<8x256xf32>
    %324 = arith.mulf %289, %323 : vector<8x256xf32>
    %325 = arith.addf %320, %324 : vector<8x256xf32>
    %c255_i32_95 = arith.constant 255 : i32
    %326 = tpu.dynamic_rotate %289 by %c255_i32_95 dim 1 : vector<8x256xf32>, i32 -> vector<8x256xf32>
    %327 = vector.broadcast %126 : vector<1x256xf32> to vector<8x256xf32>
    %328 = arith.mulf %326, %327 : vector<8x256xf32>
    %329 = vector.extract_strided_slice %2 {offsets = [5, 0, 0], sizes = [1, 8, 1], strides = [1, 1, 1]} : vector<9x8x1xf32> to vector<1x8x1xf32>
    %330 = vector.shape_cast %329 : vector<1x8x1xf32> to vector<8x1xf32>
    %331 = vector.broadcast %330 : vector<8x1xf32> to vector<8x256xf32>
    %332 = arith.mulf %328, %331 : vector<8x256xf32>
    %333 = arith.addf %325, %332 : vector<8x256xf32>
    %c241_i32_96 = arith.constant 241 : i32
    %334 = tpu.dynamic_rotate %289 by %c241_i32_96 dim 1 : vector<8x256xf32>, i32 -> vector<8x256xf32>
    %335 = vector.broadcast %147 : vector<1x256xf32> to vector<8x256xf32>
    %336 = arith.mulf %334, %335 : vector<8x256xf32>
    %337 = vector.extract_strided_slice %2 {offsets = [6, 0, 0], sizes = [1, 8, 1], strides = [1, 1, 1]} : vector<9x8x1xf32> to vector<1x8x1xf32>
    %338 = vector.shape_cast %337 : vector<1x8x1xf32> to vector<8x1xf32>
    %339 = vector.broadcast %338 : vector<8x1xf32> to vector<8x256xf32>
    %340 = arith.mulf %336, %339 : vector<8x256xf32>
    %341 = arith.addf %333, %340 : vector<8x256xf32>
    %c240_i32_97 = arith.constant 240 : i32
    %342 = tpu.dynamic_rotate %289 by %c240_i32_97 dim 1 : vector<8x256xf32>, i32 -> vector<8x256xf32>
    %343 = vector.broadcast %168 : vector<1x256xf32> to vector<8x256xf32>
    %344 = arith.mulf %342, %343 : vector<8x256xf32>
    %345 = vector.extract_strided_slice %2 {offsets = [7, 0, 0], sizes = [1, 8, 1], strides = [1, 1, 1]} : vector<9x8x1xf32> to vector<1x8x1xf32>
    %346 = vector.shape_cast %345 : vector<1x8x1xf32> to vector<8x1xf32>
    %347 = vector.broadcast %346 : vector<8x1xf32> to vector<8x256xf32>
    %348 = arith.mulf %344, %347 : vector<8x256xf32>
    %349 = arith.addf %341, %348 : vector<8x256xf32>
    %c239_i32_98 = arith.constant 239 : i32
    %350 = tpu.dynamic_rotate %289 by %c239_i32_98 dim 1 : vector<8x256xf32>, i32 -> vector<8x256xf32>
    %351 = vector.broadcast %189 : vector<1x256xf32> to vector<8x256xf32>
    %352 = arith.mulf %350, %351 : vector<8x256xf32>
    %353 = vector.extract_strided_slice %2 {offsets = [8, 0, 0], sizes = [1, 8, 1], strides = [1, 1, 1]} : vector<9x8x1xf32> to vector<1x8x1xf32>
    %354 = vector.shape_cast %353 : vector<1x8x1xf32> to vector<8x1xf32>
    %355 = vector.broadcast %354 : vector<8x1xf32> to vector<8x256xf32>
    %356 = arith.mulf %352, %355 : vector<8x256xf32>
    %357 = arith.addf %349, %356 : vector<8x256xf32>
    %358 = arith.truncf %357 : vector<8x256xf32> to vector<8x256xbf16>
    %cst_99 = arith.constant dense<0.000000e+00> : vector<8x256xf32>
    %359 = tpu.matmul %3, %358, %cst_99 {dimension_numbers = #tpu.dot_dimension_numbers<[1], [0], [0], [1], [0, 0, 1, 1], [], []>} : vector<8x8xbf16>, vector<8x256xbf16>, vector<8x256xf32> -> vector<8x256xf32>
    %360 = vector.broadcast %4 : vector<8x1xf32> to vector<8x256xf32>
    %361 = arith.addf %359, %360 : vector<8x256xf32>
    %cst_100 = arith.constant 0.000000e+00 : f32
    %362 = vector.broadcast %cst_100 : f32 to vector<8x256xf32>
    %363 = arith.maximumf %361, %362 : vector<8x256xf32>
    %c1_101 = arith.constant 1 : index
    %c0_102 = arith.constant 0 : index
    %c0_103 = arith.constant 0 : index
    %364 = vector.load %arg7[%c1_101, %c0_102, %c0_103] : memref<2x16x256xf32, #tpu.memory_space<vmem>>, vector<1x8x256xf32>
    %365 = vector.shape_cast %364 : vector<1x8x256xf32> to vector<8x256xf32>
    %366 = vector.shape_cast %282 : vector<8x256xf32> to vector<1x8x256xf32>
    tpu.vector_store %arg7[%c1_101, %c0_102, %c0_103], %366 {strides = array<i32>} : memref<2x16x256xf32, #tpu.memory_space<vmem>>, vector<1x8x256xf32>,
    %c1_104 = arith.constant 1 : index
    %c8_105 = arith.constant 8 : index
    %c0_106 = arith.constant 0 : index
    %367 = vector.load %arg7[%c1_104, %c8_105, %c0_106] : memref<2x16x256xf32, #tpu.memory_space<vmem>>, vector<1x8x256xf32>
    %368 = vector.shape_cast %367 : vector<1x8x256xf32> to vector<8x256xf32>
    %369 = vector.shape_cast %363 : vector<8x256xf32> to vector<1x8x256xf32>
    tpu.vector_store %arg7[%c1_104, %c8_105, %c0_106], %369 {strides = array<i32>} : memref<2x16x256xf32, #tpu.memory_space<vmem>>, vector<1x8x256xf32>,
    return
  }
  func.func @transform_0(%arg0: i32) -> (i32, i32, i32) {
    %c0_i32 = arith.constant 0 : i32
    %c0_i32_0 = arith.constant 0 : i32
    %c0_i32_1 = arith.constant 0 : i32
    return %arg0, %c0_i32, %c0_i32_0 : i32, i32, i32
  }
  func.func @transform_1(%arg0: i32) -> (i32, i32) {
    %c0_i32 = arith.constant 0 : i32
    %c0_i32_0 = arith.constant 0 : i32
    %c0_i32_1 = arith.constant 0 : i32
    return %c0_i32, %c0_i32_0 : i32, i32
  }
  func.func @transform_2(%arg0: i32) -> (i32, i32) {
    %c0_i32 = arith.constant 0 : i32
    %c0_i32_0 = arith.constant 0 : i32
    %c0_i32_1 = arith.constant 0 : i32
    return %c0_i32, %c0_i32_0 : i32, i32
  }
  func.func @transform_3(%arg0: i32) -> (i32, i32, i32) {
    %c0_i32 = arith.constant 0 : i32
    %c0_i32_0 = arith.constant 0 : i32
    %c0_i32_1 = arith.constant 0 : i32
    %c0_i32_2 = arith.constant 0 : i32
    return %c0_i32, %c0_i32_0, %c0_i32_1 : i32, i32, i32
  }
  func.func @transform_4(%arg0: i32) -> (i32, i32) {
    %c0_i32 = arith.constant 0 : i32
    %c0_i32_0 = arith.constant 0 : i32
    %c0_i32_1 = arith.constant 0 : i32
    return %c0_i32, %c0_i32_0 : i32, i32
  }
  func.func @transform_5(%arg0: i32) -> (i32, i32) {
    %c0_i32 = arith.constant 0 : i32
    %c0_i32_0 = arith.constant 0 : i32
    %c0_i32_1 = arith.constant 0 : i32
    return %c0_i32, %c0_i32_0 : i32, i32
  }
  func.func @transform_6(%arg0: i32) -> (i32, i32, i32) {
    %c0_i32 = arith.constant 0 : i32
    %c0_i32_0 = arith.constant 0 : i32
    %c0_i32_1 = arith.constant 0 : i32
    return %arg0, %c0_i32, %c0_i32_0 : i32, i32, i32
  }
}

</mosaic_0001>

<llo_original>
// kernel: tpu_custom_call.1
$region0: #{tpu_custom_call.1}
  #allocation0 [shape = 'u32[]', space=smem, size = 0x4, offset = 0x4, fixed_abs, tag = 'smem constant byte address 0x4 - core index']
  #allocation1 [shape = 'u32[144,128]{1,0:T(1,128)}', space=vmem, size = 0x12000, scoped, tag = 'internal scratch']
  %s0 = inlined_call_operand.vmem [shape: f32[2,8,512], index: 0, kind: input, shape index: {}]
  %s1 = inlined_call_operand.vmem [shape: bf16[8,8], index: 1, kind: input, shape index: {}]
  %s2 = inlined_call_operand.vmem [shape: f32[8,1], index: 2, kind: input, shape index: {}]
  %s3 = inlined_call_operand.vmem [shape: f32[9,8,1], index: 3, kind: input, shape index: {}]
  %s4 = inlined_call_operand.vmem [shape: bf16[8,8], index: 4, kind: input, shape index: {}]
  %s5 = inlined_call_operand.vmem [shape: f32[8,1], index: 5, kind: input, shape index: {}]
  %s6 = inlined_call_operand.hbm [shape: f32[2,16,256], index: 6, kind: output, shape index: {}]
  %s7 = sld [smem:[#allocation0]]
  $region34: #{tpu_custom_call.1} parent=0
    _
  %s9 = ssub.s32 1, %s7
  %s10 = scalar_select 0, %s9, %s7
  $region1: #{tpu_custom_call.1} parent=0
    #allocation2 [shape = 'u8[32768]{0}', space=vmem, size = 0x8000, scoped, tag = 'output window, operand 0, single buffered']
    #allocation3 [shape = 's32[1]{0}', space=sflag, size = 0x4, scoped, tag = 'scoped memory for tpu_custom_call.1']
    %11 = vsyncpa [#allocation3], 0
    // Predicated region
    $region2: #{tpu_custom_call.1} parent=1 // pred_check
      _
    $region3: #{tpu_custom_call.1} parent=1 // pred_check_branch
      %13 = sbr.rel (0) target = $region5
    $region4: #{tpu_custom_call.1} parent=1 // pred_region
      _
    $region5: #{tpu_custom_call.1} parent=1 // pred_fallthru
      _
    // Predicated region
    $region6: #{tpu_custom_call.1} parent=1 // pred_check
      _
    $region7: #{tpu_custom_call.1} parent=1 // pred_check_branch
      %15 = sbr.rel (0) target = $region9
    $region8: #{tpu_custom_call.1} parent=1 // pred_region
      _
    $region9: #{tpu_custom_call.1} parent=1 // pred_fallthru
      _
    // Predicated region
    $region10: #{tpu_custom_call.1} parent=1 // pred_check
      _
    $region11: #{tpu_custom_call.1} parent=1 // pred_check_branch
      %17 = sbr.rel (0) target = $region13
    $region12: #{tpu_custom_call.1} parent=1 // pred_region
      _
    $region13: #{tpu_custom_call.1} parent=1 // pred_fallthru
      _
    // Predicated region
    $region14: #{tpu_custom_call.1} parent=1 // pred_check
      _
    $region15: #{tpu_custom_call.1} parent=1 // pred_check_branch
      %19 = sbr.rel (0) target = $region17
    $region16: #{tpu_custom_call.1} parent=1 // pred_region
      _
    $region17: #{tpu_custom_call.1} parent=1 // pred_fallthru
      _
    // Predicated region
    $region18: #{tpu_custom_call.1} parent=1 // pred_check
      _
    $region19: #{tpu_custom_call.1} parent=1 // pred_check_branch
      %21 = sbr.rel (0) target = $region21
    $region20: #{tpu_custom_call.1} parent=1 // pred_region
      _
    $region21: #{tpu_custom_call.1} parent=1 // pred_fallthru
      _
    // Predicated region
    $region22: #{tpu_custom_call.1} parent=1 // pred_check
      _
    $region23: #{tpu_custom_call.1} parent=1 // pred_check_branch
      %23 = sbr.rel (0) target = $region25
    $region24: #{tpu_custom_call.1} parent=1 // pred_region
      _
    $region25: #{tpu_custom_call.1} parent=1 // pred_fallthru
      _
    %v25 = vld [vmem:[%s1] sm:$0xf]
    %v26 = vld [vmem:[%s2] sm:$0xff]
    %v27 = vld [vmem:[%s3] sm:$0xff]
    %v28 = vld [vmem:[%s3 + $0x8] sm:$0xff]
    %v29 = vld [vmem:[%s3 + $0x10] sm:$0xff]
    %v30 = vld [vmem:[%s3 + $0x18] sm:$0xff]
    %v31 = vld [vmem:[%s3 + $0x20] sm:$0xff]
    %v32 = vld [vmem:[%s3 + $0x28] sm:$0xff]
    %v33 = vld [vmem:[%s3 + $0x30] sm:$0xff]
    %v34 = vld [vmem:[%s3 + $0x38] sm:$0xff]
    %v35 = vld [vmem:[%s3 + $0x40] sm:$0xff]
    %v36 = vld [vmem:[%s4] sm:$0xf]
    %v37 = vld [vmem:[%s5] sm:$0xff]
    %v38 = vlaneseq
    %v39 = vand.u32 %v38, 127
    %v40 = vadd.s32 %v39, 128
    %vm41 = vcmp.lt.s32.totalorder %v39, 0
    %v42 = vsub.s32 0, %v39
    %v43 = vsel %vm41, %v42, %v39
    %v44 = vshrl.u32 %v43, 4
    %v45 = vand.u32 %v43, 15
    %v46 = vsub.s32 0, %v45
    %v47 = vsel %vm41, %v46, %v45
    %vm48 = vcmp.lt.s32.totalorder %v40, 0
    %v49 = vsub.s32 0, %v40
    %v50 = vsel %vm48, %v49, %v40
    %v51 = vshrl.u32 %v50, 4
    %v52 = vand.u32 %v50, 15
    %v53 = vsub.s32 0, %v52
    %v54 = vsel %vm48, %v53, %v52
    %vm55 = vcmp.ne.s32.totalorder %v47, 0
    %vm56 = vcmp.ne.s32.totalorder %v54, 0
    %vm57 = vcmp.lt.s32.totalorder %v47, 0
    %vm58 = vcmp.lt.s32.totalorder %v54, 0
    %vm59 = vmand %vm57, %vm55
    %vm60 = vmand %vm58, %vm56
    %v61 = vadd.s32 %v47, 16
    %v62 = vadd.s32 %v54, 16
    %v63 = vsel %vm59, %v61, %v47
    %v64 = vsel %vm60, %v62, %v54
    %v65 = vadd.s32 %v39, 4294967280
    %v66 = vadd.s32 %v40, 4294967280
    %vm67 = vcmp.ge.s32.totalorder %v65, 0
    %vm68 = vcmp.ge.s32.totalorder %v66, 0
    %vm69 = vcmp.lt.s32.totalorder %v65, 256
    %vm70 = vcmp.lt.s32.totalorder %v66, 256
    %vm71 = vmand %vm67, %vm69
    %vm72 = vmand %vm68, %vm70
    %v73 = vadd.s32 %v63, 4294967295
    %v74 = vadd.s32 %v64, 4294967295
    %vm75 = vcmp.ge.s32.totalorder %v73, 0
    %vm76 = vcmp.ge.s32.totalorder %v74, 0
    %vm77 = vcmp.lt.s32.totalorder %v73, 16
    %vm78 = vcmp.lt.s32.totalorder %v74, 16
    %vm79 = vmand %vm75, %vm77
    %vm80 = vmand %vm76, %vm78
    %vm81 = vmand %vm71, %vm79
    %vm82 = vmand %vm72, %vm80
    %v83 = vsel %vm81, 1, 0
    %v84 = vsel %vm82, 1, 0
    %v85 = vcvt.s32.f32 %v83
    %v86 = vcvt.s32.f32 %v84
    %vm87 = vcmp.ge.s32.totalorder %v63, 0
    %vm88 = vcmp.ge.s32.totalorder %v64, 0
    %vm89 = vcmp.lt.s32.totalorder %v63, 16
    %vm90 = vcmp.lt.s32.totalorder %v64, 16
    %vm91 = vmand %vm87, %vm89
    %vm92 = vmand %vm88, %vm90
    %vm93 = vmand %vm71, %vm91
    %vm94 = vmand %vm72, %vm92
    %v95 = vsel %vm93, 1, 0
    %v96 = vsel %vm94, 1, 0
    %v97 = vcvt.s32.f32 %v95
    %v98 = vcvt.s32.f32 %v96
    %v99 = vadd.s32 %v63, 1
    %v100 = vadd.s32 %v64, 1
    %vm101 = vcmp.ge.s32.totalorder %v99, 0
    %vm102 = vcmp.ge.s32.totalorder %v100, 0
    %vm103 = vcmp.lt.s32.totalorder %v99, 16
    %vm104 = vcmp.lt.s32.totalorder %v100, 16
    %vm105 = vmand %vm101, %vm103
    %vm106 = vmand %vm102, %vm104
    %vm107 = vmand %vm71, %vm105
    %vm108 = vmand %vm72, %vm106
    %v109 = vsel %vm107, 1, 0
    %v110 = vsel %vm108, 1, 0
    %v111 = vcvt.s32.f32 %v109
    %v112 = vcvt.s32.f32 %v110
    %vm113 = vcmp.ge.s32.totalorder %v39, 0
    %vm114 = vcmp.ge.s32.totalorder %v40, 0
    %vm115 = vcmp.lt.s32.totalorder %v39, 256
    %vm116 = vcmp.lt.s32.totalorder %v40, 256
    %vm117 = vmand %vm113, %vm115
    %vm118 = vmand %vm114, %vm116
    %vm119 = vmand %vm117, %vm79
    %vm120 = vmand %vm118, %vm80
    %v121 = vsel %vm119, 1, 0
    %v122 = vsel %vm120, 1, 0
    %v123 = vcvt.s32.f32 %v121
    %v124 = vcvt.s32.f32 %v122
    %vm125 = vmand %vm117, %vm105
    %vm126 = vmand %vm118, %vm106
    %v127 = vsel %vm125, 1, 0
    %v128 = vsel %vm126, 1, 0
    %v129 = vcvt.s32.f32 %v127
    %v130 = vcvt.s32.f32 %v128
    %v131 = vadd.s32 %v39, 16
    %v132 = vadd.s32 %v40, 16
    %vm133 = vcmp.ge.s32.totalorder %v131, 0
    %vm134 = vcmp.ge.s32.totalorder %v132, 0
    %vm135 = vcmp.lt.s32.totalorder %v131, 256
    %vm136 = vcmp.lt.s32.totalorder %v132, 256
    %vm137 = vmand %vm133, %vm135
    %vm138 = vmand %vm134, %vm136
    %vm139 = vmand %vm137, %vm79
    %vm140 = vmand %vm138, %vm80
    %v141 = vsel %vm139, 1, 0
    %v142 = vsel %vm140, 1, 0
    %v143 = vcvt.s32.f32 %v141
    %v144 = vcvt.s32.f32 %v142
    %vm145 = vmand %vm137, %vm91
    %vm146 = vmand %vm138, %vm92
    %v147 = vsel %vm145, 1, 0
    %v148 = vsel %vm146, 1, 0
    %v149 = vcvt.s32.f32 %v147
    %v150 = vcvt.s32.f32 %v148
    %vm151 = vmand %vm137, %vm105
    %vm152 = vmand %vm138, %vm106
    %v153 = vsel %vm151, 1, 0
    %v154 = vsel %vm152, 1, 0
    %v155 = vcvt.s32.f32 %v153
    %v156 = vcvt.s32.f32 %v154
    %v157 = vld [vmem:[%s0] sm:$0xff]
    %v158 = vld [vmem:[%s0 + $0x8] sm:$0xff]
    %v159 = vld [vmem:[%s0 + $0x10] sm:$0xff]
    %v160 = vld [vmem:[%s0 + $0x18] sm:$0xff]
    %v161 = vpack.c.bf16 %v159, %v159
    %v162 = vpack.c.bf16 %v160, %v160
    %164 = vset.pattern.permute.xlu0 0
    %165 = vperm.xlu0 %164, %v26
    %v166 = vpop.permute.xlu0 %165
    %vm168 = vcmask 64512
    %v170 = vsel %vm168, %v25, 0
    %vm172 = vcmask 1043456
    %v174 = vsel %vm172, %v161, 0
    %v177 = vsel %vm172, %v162, 0
    %179 = vmatprep.subr.bf16.mxu0 %v177
    %180 = vmatpush1.bf16.msra.mxu0 %v174
    %181 = vmatprep.subr.bf16.mxu0 0
    %182 = vmatpush1.bf16.msra.mxu0 0
    %183 = vmatprep.subr.bf16.mxu0 0
    %184 = vmatpush1.bf16.msra.mxu0 0
    %185 = vmatprep.subr.bf16.mxu0 0
    %186 = vmatpush1.bf16.msra.mxu0 0
    %187 = vmatprep.subr.bf16.mxu0 0
    %188 = vmatpush1.bf16.msra.mxu0 0
    %189 = vmatprep.subr.bf16.mxu0 0
    %190 = vmatpush1.bf16.msra.mxu0 0
    %191 = vmatprep.subr.bf16.mxu0 0
    %192 = vmatpush1.bf16.msra.mxu0 0
    %193 = vmatprep.subr.bf16.mxu0 0
    %194 = vmatpush1.bf16.msra.mxu0 0
    %195 = vmatprep.subr.bf16.mxu0 0
    %196 = vmatpush1.bf16.msra.mxu0 0
    %197 = vmatprep.subr.bf16.mxu0 0
    %198 = vmatpush1.bf16.msra.mxu0 0
    %199 = vmatprep.subr.bf16.mxu0 0
    %200 = vmatpush1.bf16.msra.mxu0 0
    %201 = vmatprep.subr.bf16.mxu0 0
    %202 = vmatpush1.bf16.msra.mxu0 0
    %203 = vmatprep.subr.bf16.mxu0 0
    %204 = vmatpush1.bf16.msra.mxu0 0
    %205 = vmatprep.subr.bf16.mxu0 0
    %206 = vmatpush1.bf16.msra.mxu0 0
    %207 = vmatprep.subr.bf16.mxu0 0
    %208 = vmatpush1.bf16.msra.mxu0 0
    %209 = vmatprep.subr.bf16.mxu0 0
    %210 = vmatpush1.bf16.msra.mxu0 0
    %211 = vmatprep.mubr.bf16.mxu0 0
    %212 = vmatmul.mubr.bf16.gmra.mrb[0].mxu0 %v170
    %v213 = vpop.f32.mrb[0].mxu0
    %v214 = vadd.f32 %v166, %v213
    %v215 = vpop.f32.mrb[0].mxu0
    %v216 = vadd.f32 %v166, %v215
    %v217 = vpop.f32.mrb[0].mxu0
    %v218 = vpop.f32.mrb[0].mxu0
    %219 = vdwg.mxu0
    %v220 = vmax.f32 %v214, 0.0
    %v221 = vmax.f32 %v216, 0.0
    %222 = vrot.lane.b32.xlu0 %v220, 17
    %v223 = vpop.permute.xlu0 %222
    %224 = vrot.lane.b32.xlu0 %v221, 17
    %v225 = vpop.permute.xlu0 %224
    %vm226 = vcmp.lt.s32.totalorder %v39, 17
    %v227 = vsel %vm226, %v223, %v225
    %v228 = vsel %vm226, %v225, %v223
    %v229 = vmul.f32 %v228, %v85
    %v230 = vmul.f32 %v227, %v86
    %232 = vset.pattern.permute.xlu0 0
    %233 = vperm.xlu0 %232, %v27
    %v234 = vpop.permute.xlu0 %233
    %v236 = vmul.f32 %v229, %v234
    %v237 = vmul.f32 %v230, %v234
    %238 = vrot.lane.b32.xlu0 %v220, 16
    %v239 = vpop.permute.xlu0 %238
    %240 = vrot.lane.b32.xlu0 %v221, 16
    %v241 = vpop.permute.xlu0 %240
    %vm242 = vcmp.lt.s32.totalorder %v39, 16
    %v243 = vsel %vm242, %v239, %v241
    %v244 = vsel %vm242, %v241, %v239
    %v245 = vmul.f32 %v244, %v97
    %v246 = vmul.f32 %v243, %v98
    %248 = vset.pattern.permute.xlu0 0
    %249 = vperm.xlu0 %248, %v28
    %v250 = vpop.permute.xlu0 %249
    %v252 = vmul.f32 %v245, %v250
    %v253 = vmul.f32 %v246, %v250
    %v254 = vadd.f32 %v236, %v252
    %v255 = vadd.f32 %v237, %v253
    %256 = vrot.lane.b32.xlu0 %v220, 15
    %v257 = vpop.permute.xlu0 %256
    %258 = vrot.lane.b32.xlu0 %v221, 15
    %v259 = vpop.permute.xlu0 %258
    %vm260 = vcmp.lt.s32.totalorder %v39, 15
    %v261 = vsel %vm260, %v257, %v259
    %v262 = vsel %vm260, %v259, %v257
    %v263 = vmul.f32 %v262, %v111
    %v264 = vmul.f32 %v261, %v112
    %266 = vset.pattern.permute.xlu0 0
    %267 = vperm.xlu0 %266, %v29
    %v268 = vpop.permute.xlu0 %267
    %v270 = vmul.f32 %v263, %v268
    %v271 = vmul.f32 %v264, %v268
    %v272 = vadd.f32 %v254, %v270
    %v273 = vadd.f32 %v255, %v271
    %274 = vrot.lane.b32.xlu0 %v220, 1
    %v275 = vpop.permute.xlu0 %274
    %276 = vrot.lane.b32.xlu0 %v221, 1
    %v277 = vpop.permute.xlu0 %276
    %vm278 = vcmp.lt.s32.totalorder %v39, 1
    %v279 = vsel %vm278, %v275, %v277
    %v280 = vsel %vm278, %v277, %v275
    %v281 = vmul.f32 %v280, %v123
    %v282 = vmul.f32 %v279, %v124
    %284 = vset.pattern.permute.xlu0 0
    %285 = vperm.xlu0 %284, %v30
    %v286 = vpop.permute.xlu0 %285
    %v288 = vmul.f32 %v281, %v286
    %v289 = vmul.f32 %v282, %v286
    %v290 = vadd.f32 %v272, %v288
    %v291 = vadd.f32 %v273, %v289
    %293 = vset.pattern.permute.xlu0 0
    %294 = vperm.xlu0 %293, %v31
    %v295 = vpop.permute.xlu0 %294
    %v297 = vmul.f32 %v220, %v295
    %v298 = vmul.f32 %v221, %v295
    %v299 = vadd.f32 %v290, %v297
    %v300 = vadd.f32 %v291, %v298
    %301 = vrot.lane.b32.xlu0 %v220, 127
    %v302 = vpop.permute.xlu0 %301
    %303 = vrot.lane.b32.xlu0 %v221, 127
    %v304 = vpop.permute.xlu0 %303
    %vm305 = vcmp.lt.s32.totalorder %v39, 127
    %v306 = vsel %vm305, %v302, %v304
    %v307 = vsel %vm305, %v304, %v302
    %v308 = vmul.f32 %v306, %v129
    %v309 = vmul.f32 %v307, %v130
    %311 = vset.pattern.permute.xlu0 0
    %312 = vperm.xlu0 %311, %v32
    %v313 = vpop.permute.xlu0 %312
    %v315 = vmul.f32 %v308, %v313
    %v316 = vmul.f32 %v309, %v313
    %v317 = vadd.f32 %v299, %v315
    %v318 = vadd.f32 %v300, %v316
    %319 = vrot.lane.b32.xlu0 %v220, 113
    %v320 = vpop.permute.xlu0 %319
    %321 = vrot.lane.b32.xlu0 %v221, 113
    %v322 = vpop.permute.xlu0 %321
    %vm323 = vcmp.lt.s32.totalorder %v39, 113
    %v324 = vsel %vm323, %v320, %v322
    %v325 = vsel %vm323, %v322, %v320
    %v326 = vmul.f32 %v324, %v143
    %v327 = vmul.f32 %v325, %v144
    %329 = vset.pattern.permute.xlu0 0
    %330 = vperm.xlu0 %329, %v33
    %v331 = vpop.permute.xlu0 %330
    %v333 = vmul.f32 %v326, %v331
    %v334 = vmul.f32 %v327, %v331
    %v335 = vadd.f32 %v317, %v333
    %v336 = vadd.f32 %v318, %v334
    %337 = vrot.lane.b32.xlu0 %v220, 112
    %v338 = vpop.permute.xlu0 %337
    %339 = vrot.lane.b32.xlu0 %v221, 112
    %v340 = vpop.permute.xlu0 %339
    %vm341 = vcmp.lt.s32.totalorder %v39, 112
    %v342 = vsel %vm341, %v338, %v340
    %v343 = vsel %vm341, %v340, %v338
    %v344 = vmul.f32 %v342, %v149
    %v345 = vmul.f32 %v343, %v150
    %347 = vset.pattern.permute.xlu0 0
    %348 = vperm.xlu0 %347, %v34
    %v349 = vpop.permute.xlu0 %348
    %v351 = vmul.f32 %v344, %v349
    %v352 = vmul.f32 %v345, %v349
    %v353 = vadd.f32 %v335, %v351
    %v354 = vadd.f32 %v336, %v352
    %355 = vrot.lane.b32.xlu0 %v220, 111
    %v356 = vpop.permute.xlu0 %355
    %357 = vrot.lane.b32.xlu0 %v221, 111
    %v358 = vpop.permute.xlu0 %357
    %vm359 = vcmp.lt.s32.totalorder %v39, 111
    %v360 = vsel %vm359, %v356, %v358
    %v361 = vsel %vm359, %v358, %v356
    %v362 = vmul.f32 %v360, %v155
    %v363 = vmul.f32 %v361, %v156
    %365 = vset.pattern.permute.xlu0 0
    %366 = vperm.xlu0 %365, %v35
    %v367 = vpop.permute.xlu0 %366
    %v369 = vmul.f32 %v362, %v367
    %v370 = vmul.f32 %v363, %v367
    %v371 = vadd.f32 %v353, %v369
    %v372 = vadd.f32 %v354, %v370
    %v373 = vpack.c.bf16 %v371, %v371
    %v374 = vpack.c.bf16 %v372, %v372
    %376 = vset.pattern.permute.xlu0 0
    %377 = vperm.xlu0 %376, %v37
    %v378 = vpop.permute.xlu0 %377
    %v381 = vsel %vm168, %v36, 0
    %v384 = vsel %vm172, %v373, 0
    %v387 = vsel %vm172, %v374, 0
    %389 = vmatprep.subr.bf16.mxu0 %v387
    %390 = vmatpush1.bf16.msra.mxu0 %v384
    %391 = vmatprep.subr.bf16.mxu0 0
    %392 = vmatpush1.bf16.msra.mxu0 0
    %393 = vmatprep.subr.bf16.mxu0 0
    %394 = vmatpush1.bf16.msra.mxu0 0
    %395 = vmatprep.subr.bf16.mxu0 0
    %396 = vmatpush1.bf16.msra.mxu0 0
    %397 = vmatprep.subr.bf16.mxu0 0
    %398 = vmatpush1.bf16.msra.mxu0 0
    %399 = vmatprep.subr.bf16.mxu0 0
    %400 = vmatpush1.bf16.msra.mxu0 0
    %401 = vmatprep.subr.bf16.mxu0 0
    %402 = vmatpush1.bf16.msra.mxu0 0
    %403 = vmatprep.subr.bf16.mxu0 0
    %404 = vmatpush1.bf16.msra.mxu0 0
    %405 = vmatprep.subr.bf16.mxu0 0
    %406 = vmatpush1.bf16.msra.mxu0 0
    %407 = vmatprep.subr.bf16.mxu0 0
    %408 = vmatpush1.bf16.msra.mxu0 0
    %409 = vmatprep.subr.bf16.mxu0 0
    %410 = vmatpush1.bf16.msra.mxu0 0
    %411 = vmatprep.subr.bf16.mxu0 0
    %412 = vmatpush1.bf16.msra.mxu0 0
    %413 = vmatprep.subr.bf16.mxu0 0
    %414 = vmatpush1.bf16.msra.mxu0 0
    %415 = vmatprep.subr.bf16.mxu0 0
    %416 = vmatpush1.bf16.msra.mxu0 0
    %417 = vmatprep.subr.bf16.mxu0 0
    %418 = vmatpush1.bf16.msra.mxu0 0
    %419 = vmatprep.subr.bf16.mxu0 0
    %420 = vmatpush1.bf16.msra.mxu0 0
    %421 = vmatprep.mubr.bf16.mxu0 0
    %422 = vmatmul.mubr.bf16.gmra.mrb[0].mxu0 %v381
    %v423 = vpop.f32.mrb[0].mxu0
    %v424 = vadd.f32 %v378, %v423
    %v425 = vpop.f32.mrb[0].mxu0
    %v426 = vadd.f32 %v378, %v425
    %v427 = vpop.f32.mrb[0].mxu0
    %v428 = vpop.f32.mrb[0].mxu0
    %429 = vdwg.mxu0
    %v430 = vmax.f32 %v424, 0.0
    %v431 = vmax.f32 %v426, 0.0
    %432 = vst [vmem:[#allocation2] sm:$0xff] %v157
    %433 = vst [vmem:[#allocation2 + $0x8] sm:$0xff] %v158
    %434 = vst [vmem:[#allocation2 + $0x10] sm:$0xff] %v430
    %435 = vst [vmem:[#allocation2 + $0x18] sm:$0xff] %v431
    %s436 = scalar_lea.vmem %s0, 32
    %v437 = vld [vmem:[%s436] sm:$0xff]
    %v438 = vld [vmem:[%s436 + $0x8] sm:$0xff]
    %v439 = vld [vmem:[%s436 + $0x10] sm:$0xff]
    %v440 = vld [vmem:[%s436 + $0x18] sm:$0xff]
    %v441 = vpack.c.bf16 %v439, %v439
    %v442 = vpack.c.bf16 %v440, %v440
    %v444 = vsel %vm172, %v441, 0
    %v447 = vsel %vm172, %v442, 0
    %449 = vmatprep.subr.bf16.mxu0 %v447
    %450 = vmatpush1.bf16.msra.mxu0 %v444
    %451 = vmatprep.subr.bf16.mxu0 0
    %452 = vmatpush1.bf16.msra.mxu0 0
    %453 = vmatprep.subr.bf16.mxu0 0
    %454 = vmatpush1.bf16.msra.mxu0 0
    %455 = vmatprep.subr.bf16.mxu0 0
    %456 = vmatpush1.bf16.msra.mxu0 0
    %457 = vmatprep.subr.bf16.mxu0 0
    %458 = vmatpush1.bf16.msra.mxu0 0
    %459 = vmatprep.subr.bf16.mxu0 0
    %460 = vmatpush1.bf16.msra.mxu0 0
    %461 = vmatprep.subr.bf16.mxu0 0
    %462 = vmatpush1.bf16.msra.mxu0 0
    %463 = vmatprep.subr.bf16.mxu0 0
    %464 = vmatpush1.bf16.msra.mxu0 0
    %465 = vmatprep.subr.bf16.mxu0 0
    %466 = vmatpush1.bf16.msra.mxu0 0
    %467 = vmatprep.subr.bf16.mxu0 0
    %468 = vmatpush1.bf16.msra.mxu0 0
    %469 = vmatprep.subr.bf16.mxu0 0
    %470 = vmatpush1.bf16.msra.mxu0 0
    %471 = vmatprep.subr.bf16.mxu0 0
    %472 = vmatpush1.bf16.msra.mxu0 0
    %473 = vmatprep.subr.bf16.mxu0 0
    %474 = vmatpush1.bf16.msra.mxu0 0
    %475 = vmatprep.subr.bf16.mxu0 0
    %476 = vmatpush1.bf16.msra.mxu0 0
    %477 = vmatprep.subr.bf16.mxu0 0
    %478 = vmatpush1.bf16.msra.mxu0 0
    %479 = vmatprep.subr.bf16.mxu0 0
    %480 = vmatpush1.bf16.msra.mxu0 0
    %481 = vmatprep.mubr.bf16.mxu0 0
    %482 = vmatmul.mubr.bf16.gmra.mrb[0].mxu0 %v170
    %v483 = vpop.f32.mrb[0].mxu0
    %v484 = vadd.f32 %v166, %v483
    %v485 = vpop.f32.mrb[0].mxu0
    %v486 = vadd.f32 %v166, %v485
    %v487 = vpop.f32.mrb[0].mxu0
    %v488 = vpop.f32.mrb[0].mxu0
    %489 = vdwg.mxu0
    %v490 = vmax.f32 %v484, 0.0
    %v491 = vmax.f32 %v486, 0.0
    %492 = vrot.lane.b32.xlu0 %v490, 17
    %v493 = vpop.permute.xlu0 %492
    %494 = vrot.lane.b32.xlu0 %v491, 17
    %v495 = vpop.permute.xlu0 %494
    %v496 = vsel %vm226, %v493, %v495
    %v497 = vsel %vm226, %v495, %v493
    %v498 = vmul.f32 %v497, %v85
    %v499 = vmul.f32 %v496, %v86
    %v500 = vmul.f32 %v498, %v234
    %v501 = vmul.f32 %v499, %v234
    %502 = vrot.lane.b32.xlu0 %v490, 16
    %v503 = vpop.permute.xlu0 %502
    %504 = vrot.lane.b32.xlu0 %v491, 16
    %v505 = vpop.permute.xlu0 %504
    %v506 = vsel %vm242, %v503, %v505
    %v507 = vsel %vm242, %v505, %v503
    %v508 = vmul.f32 %v507, %v97
    %v509 = vmul.f32 %v506, %v98
    %v510 = vmul.f32 %v508, %v250
    %v511 = vmul.f32 %v509, %v250
    %v512 = vadd.f32 %v500, %v510
    %v513 = vadd.f32 %v501, %v511
    %514 = vrot.lane.b32.xlu0 %v490, 15
    %v515 = vpop.permute.xlu0 %514
    %516 = vrot.lane.b32.xlu0 %v491, 15
    %v517 = vpop.permute.xlu0 %516
    %v518 = vsel %vm260, %v515, %v517
    %v519 = vsel %vm260, %v517, %v515
    %v520 = vmul.f32 %v519, %v111
    %v521 = vmul.f32 %v518, %v112
    %v522 = vmul.f32 %v520, %v268
    %v523 = vmul.f32 %v521, %v268
    %v524 = vadd.f32 %v512, %v522
    %v525 = vadd.f32 %v513, %v523
    %526 = vrot.lane.b32.xlu0 %v490, 1
    %v527 = vpop.permute.xlu0 %526
    %528 = vrot.lane.b32.xlu0 %v491, 1
    %v529 = vpop.permute.xlu0 %528
    %v530 = vsel %vm278, %v527, %v529
    %v531 = vsel %vm278, %v529, %v527
    %v532 = vmul.f32 %v531, %v123
    %v533 = vmul.f32 %v530, %v124
    %v534 = vmul.f32 %v532, %v286
    %v535 = vmul.f32 %v533, %v286
    %v536 = vadd.f32 %v524, %v534
    %v537 = vadd.f32 %v525, %v535
    %v538 = vmul.f32 %v490, %v295
    %v539 = vmul.f32 %v491, %v295
    %v540 = vadd.f32 %v536, %v538
    %v541 = vadd.f32 %v537, %v539
    %542 = vrot.lane.b32.xlu0 %v490, 127
    %v543 = vpop.permute.xlu0 %542
    %544 = vrot.lane.b32.xlu0 %v491, 127
    %v545 = vpop.permute.xlu0 %544
    %v546 = vsel %vm305, %v543, %v545
    %v547 = vsel %vm305, %v545, %v543
    %v548 = vmul.f32 %v546, %v129
    %v549 = vmul.f32 %v547, %v130
    %v550 = vmul.f32 %v548, %v313
    %v551 = vmul.f32 %v549, %v313
    %v552 = vadd.f32 %v540, %v550
    %v553 = vadd.f32 %v541, %v551
    %554 = vrot.lane.b32.xlu0 %v490, 113
    %v555 = vpop.permute.xlu0 %554
    %556 = vrot.lane.b32.xlu0 %v491, 113
    %v557 = vpop.permute.xlu0 %556
    %v558 = vsel %vm323, %v555, %v557
    %v559 = vsel %vm323, %v557, %v555
    %v560 = vmul.f32 %v558, %v143
    %v561 = vmul.f32 %v559, %v144
    %v562 = vmul.f32 %v560, %v331
    %v563 = vmul.f32 %v561, %v331
    %v564 = vadd.f32 %v552, %v562
    %v565 = vadd.f32 %v553, %v563
    %566 = vrot.lane.b32.xlu0 %v490, 112
    %v567 = vpop.permute.xlu0 %566
    %568 = vrot.lane.b32.xlu0 %v491, 112
    %v569 = vpop.permute.xlu0 %568
    %v570 = vsel %vm341, %v567, %v569
    %v571 = vsel %vm341, %v569, %v567
    %v572 = vmul.f32 %v570, %v149
    %v573 = vmul.f32 %v571, %v150
    %v574 = vmul.f32 %v572, %v349
    %v575 = vmul.f32 %v573, %v349
    %v576 = vadd.f32 %v564, %v574
    %v577 = vadd.f32 %v565, %v575
    %578 = vrot.lane.b32.xlu0 %v490, 111
    %v579 = vpop.permute.xlu0 %578
    %580 = vrot.lane.b32.xlu0 %v491, 111
    %v581 = vpop.permute.xlu0 %580
    %v582 = vsel %vm359, %v579, %v581
    %v583 = vsel %vm359, %v581, %v579
    %v584 = vmul.f32 %v582, %v155
    %v585 = vmul.f32 %v583, %v156
    %v586 = vmul.f32 %v584, %v367
    %v587 = vmul.f32 %v585, %v367
    %v588 = vadd.f32 %v576, %v586
    %v589 = vadd.f32 %v577, %v587
    %v590 = vpack.c.bf16 %v588, %v588
    %v591 = vpack.c.bf16 %v589, %v589
    %v593 = vsel %vm172, %v590, 0
    %v596 = vsel %vm172, %v591, 0
    %598 = vmatprep.subr.bf16.mxu0 %v596
    %599 = vmatpush1.bf16.msra.mxu0 %v593
    %600 = vmatprep.subr.bf16.mxu0 0
    %601 = vmatpush1.bf16.msra.mxu0 0
    %602 = vmatprep.subr.bf16.mxu0 0
    %603 = vmatpush1.bf16.msra.mxu0 0
    %604 = vmatprep.subr.bf16.mxu0 0
    %605 = vmatpush1.bf16.msra.mxu0 0
    %606 = vmatprep.subr.bf16.mxu0 0
    %607 = vmatpush1.bf16.msra.mxu0 0
    %608 = vmatprep.subr.bf16.mxu0 0
    %609 = vmatpush1.bf16.msra.mxu0 0
    %610 = vmatprep.subr.bf16.mxu0 0
    %611 = vmatpush1.bf16.msra.mxu0 0
    %612 = vmatprep.subr.bf16.mxu0 0
    %613 = vmatpush1.bf16.msra.mxu0 0
    %614 = vmatprep.subr.bf16.mxu0 0
    %615 = vmatpush1.bf16.msra.mxu0 0
    %616 = vmatprep.subr.bf16.mxu0 0
    %617 = vmatpush1.bf16.msra.mxu0 0
    %618 = vmatprep.subr.bf16.mxu0 0
    %619 = vmatpush1.bf16.msra.mxu0 0
    %620 = vmatprep.subr.bf16.mxu0 0
    %621 = vmatpush1.bf16.msra.mxu0 0
    %622 = vmatprep.subr.bf16.mxu0 0
    %623 = vmatpush1.bf16.msra.mxu0 0
    %624 = vmatprep.subr.bf16.mxu0 0
    %625 = vmatpush1.bf16.msra.mxu0 0
    %626 = vmatprep.subr.bf16.mxu0 0
    %627 = vmatpush1.bf16.msra.mxu0 0
    %628 = vmatprep.subr.bf16.mxu0 0
    %629 = vmatpush1.bf16.msra.mxu0 0
    %630 = vmatprep.mubr.bf16.mxu0 0
    %631 = vmatmul.mubr.bf16.gmra.mrb[0].mxu0 %v381
    %v632 = vpop.f32.mrb[0].mxu0
    %v633 = vadd.f32 %v378, %v632
    %v634 = vpop.f32.mrb[0].mxu0
    %v635 = vadd.f32 %v378, %v634
    %v636 = vpop.f32.mrb[0].mxu0
    %v637 = vpop.f32.mrb[0].mxu0
    %638 = vdwg.mxu0
    %v639 = vmax.f32 %v633, 0.0
    %v640 = vmax.f32 %v635, 0.0
    %s641 = scalar_lea.vmem [#allocation2], 32
    %642 = vst [vmem:[%s641] sm:$0xff] %v437
    %643 = vst [vmem:[%s641 + $0x8] sm:$0xff] %v438
    %644 = vst [vmem:[%s641 + $0x10] sm:$0xff] %v639
    %645 = vst [vmem:[%s641 + $0x18] sm:$0xff] %v640
    // Predicated region
    $region26: #{tpu_custom_call.1} parent=1 // pred_check
      _
    $region27: #{tpu_custom_call.1} parent=1 // pred_check_branch
      %647 = sbr.rel (0) target = $region29
    $region28: #{tpu_custom_call.1} parent=1 // pred_region
      %s649 = ssub.s32 1024, 1024
      %650 = vsyncadd [#allocation3], %s649
      %s651 = sshll.u32 [#allocation2], 4
      %s652 = int_to_ptr.vmem [resolvable:$true] %s651
      %657 = dma.vmem_to_hbm [thread:$0]  %s652, 1024, %s6, [#allocation3], 256, 256, 16
    $region29: #{tpu_custom_call.1} parent=1 // pred_fallthru
      _
    // Predicated region
    $region30: #{tpu_custom_call.1} parent=1 // pred_check
      _
    $region31: #{tpu_custom_call.1} parent=1 // pred_check_branch
      %659 = sbr.rel (0) target = $region33
    $region32: #{tpu_custom_call.1} parent=1 // pred_region
      %660 = dma.done [#allocation3], 1024
    $region33: #{tpu_custom_call.1} parent=1 // pred_fallthru
      _
    %661 = vsyncpa [#allocation3], 1

</llo_original>
